<compile_context>
chip_gen: v6e
topology: v6e:2x2x1
jax: 0.10.0
libtpu: 0.0.40
codegen_flags: <defaults>
</compile_context>

<pallas_src>
import functools

import jax
import jax.numpy as jnp
from jax.experimental import pallas as pl
from jax.experimental.pallas import tpu as pltpu


# Sub-pixel phase decomposition of ConvTranspose2d(k=4, s=2, p=1): output pixel
# (2*i+ph, 2*j+pw) sums 2x2=4 kernel taps; along one axis, phase p pulls from
# (offset into the zero-padded input, kernel index):
#   p=0: (1, 1), (0, 3)        p=1: (1, 2), (2, 0)
_AXIS_TAPS = {0: ((1, 1), (0, 3)), 1: ((1, 2), (2, 0))}


def _phase_order():
    """Per phase (ph, pw): ordered (ho, wo) input offsets and (kh, kw) taps."""
    offs, ks = [], []
    for ph in (0, 1):
        for pw in (0, 1):
            o, k = [], []
            for (ho, kh) in _AXIS_TAPS[ph]:
                for (wo, kw) in _AXIS_TAPS[pw]:
                    o.append((ho, wo))
                    k.append((kh, kw))
            offs.append(tuple(o))
            ks.append(tuple(k))
    return tuple(offs), tuple(ks)


def _unet_up_kernel(xp_ref, w_ref, out_ref, acc_ref, *, H, W, C_in, C_out,
                    eps, offs):
    # xp_ref : (1, H+2, W+2, C_in)  bf16  zero-padded input (one batch element)
    # w_ref  : (4, 4*C_in, C_out)   bf16  per-phase packed ConvTranspose weight
    # out_ref: (1, H*W, 4*C_out)    f32   normalized+ReLU phases, lane-packed
    # acc_ref: (H*W, 4*C_out)       f32   VMEM scratch holding raw conv output

    # Extract each of the 9 unique shifted views exactly once (hoisted).
    views = {}

    def view(ho, wo):
        key = (ho, wo)
        if key not in views:
            v = xp_ref[0, ho:ho + H, wo:wo + W, :]            # (H, W, C_in)
            views[key] = v.reshape(H * W, C_in)
        return views[key]

    total = jnp.zeros((1, C_out), jnp.float32)
    total_sq = jnp.zeros((1, C_out), jnp.float32)

    for idx in range(4):                                      # unrolled phases
        # im2col: ONE (H*W, 4*C_in) x (4*C_in, C_out) matmul per phase.
        lhs = jnp.concatenate([view(ho, wo) for (ho, wo) in offs[idx]], axis=-1)
        acc = jnp.dot(lhs, w_ref[idx],
                      preferred_element_type=jnp.float32)     # (H*W, C_out) f32
        # Incremental InstanceNorm statistics; stash the raw phase result so
        # only one phase accumulator is live at a time.
        total = total + acc.sum(axis=0, keepdims=True)
        total_sq = total_sq + (acc * acc).sum(axis=0, keepdims=True)
        acc_ref[:, idx * C_out:(idx + 1) * C_out] = acc

    # InstanceNorm2d (affine=False, biased variance) over the full 2H x 2W
    # output, which the 4 phases exactly partition.  Clamp var >= 0 so
    # rsqrt never sees a (numerically) negative value.
    n_el = 4.0 * H * W
    mean = total / n_el                                       # (1, C_out)
    var = jnp.maximum(total_sq / n_el - mean * mean, 0.0)
    inv = jax.lax.rsqrt(var + eps)
    mean4 = jnp.concatenate([mean] * 4, axis=-1)              # (1, 4*C_out)
    inv4 = jnp.concatenate([inv] * 4, axis=-1)

    y = (acc_ref[...] - mean4) * inv4
    out_ref[0] = jnp.maximum(y, 0.0).astype(out_ref.dtype)    # single dense store


def unet_up_forward(x_nchw, skip_nchw, weight_pt, *, eps=1e-5):
    """UNetUp forward. x_nchw: (N,Cin,H,W); skip_nchw: (N,Cs,2H,2W);
    weight_pt: PyTorch ConvTranspose2d weight (Cin, Cout, 4, 4)."""
    N, C_in, H, W = x_nchw.shape
    C_out = weight_pt.shape[1]

    offs, ks = _phase_order()

    # NHWC, zero-pad spatial by 1, bf16 for the MXU (f32 accumulation in-kernel).
    x = jnp.transpose(x_nchw, (0, 2, 3, 1))
    xp = jnp.pad(x, ((0, 0), (1, 1), (1, 1), (0, 0))).astype(jnp.bfloat16)

    # Pre-pack the weight: one (4*C_in, C_out) matrix per output phase so the
    # 4 contributing taps fuse into a single matmul with K = 4*C_in.
    w_hwio = jnp.transpose(weight_pt, (2, 3, 0, 1))           # (4, 4, Cin, Cout)
    w_packed = jnp.stack(
        [jnp.concatenate([w_hwio[kh, kw] for (kh, kw) in ks[idx]], axis=0)
         for idx in range(4)], axis=0).astype(jnp.bfloat16)   # (4, 4*Cin, Cout)

    kernel = functools.partial(_unet_up_kernel, H=H, W=W, C_in=C_in,
                               C_out=C_out, eps=eps, offs=offs)

    # TODO(synk): for production-size layers (e.g. Cin>=256, H>=32) add a
    # spatial grid axis with two-pass tiled stats so blocks fit v7x's 64 MiB
    # VMEM and megacore gets work even for N=1; whole-image blocks are fine
    # for the small shapes exercised here.
    out = pl.pallas_call(
        kernel,
        out_shape=jax.ShapeDtypeStruct((N, H * W, 4 * C_out), jnp.float32),
        grid_spec=pltpu.PrefetchScalarGridSpec(
            num_scalar_prefetch=0,
            grid=(N,),
            in_specs=[
                pl.BlockSpec((1, H + 2, W + 2, C_in), lambda n: (n, 0, 0, 0)),
                pl.BlockSpec((4, 4 * C_in, C_out), lambda n: (0, 0, 0)),
            ],
            out_specs=pl.BlockSpec((1, H * W, 4 * C_out), lambda n: (n, 0, 0)),
            scratch_shapes=[pltpu.VMEM((H * W, 4 * C_out), jnp.float32)],
        ),
        compiler_params=pltpu.CompilerParams(
            dimension_semantics=("parallel",)),
    )(xp, w_packed)

    # Layout-only glue: de-interleave the 2x2 phases (channel axis is ordered
    # [ph=0,pw=0 | ph=0,pw=1 | ph=1,pw=0 | ph=1,pw=1]), concat skip, NCHW.
    y = out.reshape(N, H, W, 2, 2, C_out)                     # (n,i,j,ph,pw,c)
    y = jnp.transpose(y, (0, 1, 3, 2, 4, 5)).reshape(N, 2 * H, 2 * W, C_out)
    skip_nhwc = jnp.transpose(skip_nchw, (0, 2, 3, 1)).astype(y.dtype)
    cat = jnp.concatenate([y, skip_nhwc], axis=-1)
    return jnp.transpose(cat, (0, 3, 1, 2))                   # NCHW (PyTorch)


def _reference_forward(x_nchw, skip_nchw, weight_pt, eps=1e-5):
    """Pure-JAX reference: ConvTranspose2d == conv of lhs-dilated input with
    spatially-flipped, io-swapped kernel, padding = k-1-p = 2."""
    w_oihw = jnp.flip(weight_pt, axis=(2, 3)).transpose(1, 0, 2, 3)
    y = jax.lax.conv_general_dilated(
        x_nchw.astype(jnp.float32), w_oihw.astype(jnp.float32),
        window_strides=(1, 1), padding=((2, 2), (2, 2)),
        lhs_dilation=(2, 2), rhs_dilation=(1, 1),
        dimension_numbers=("NCHW", "OIHW", "NCHW"),
        precision=jax.lax.Precision.HIGHEST)
    mean = y.mean(axis=(2, 3), keepdims=True)
    var = ((y - mean) ** 2).mean(axis=(2, 3), keepdims=True)
    y = (y - mean) * jax.lax.rsqrt(var + eps)
    y = jnp.maximum(y, 0.0)
    return jnp.concatenate([y, skip_nchw.astype(jnp.float32)], axis=1)


if __name__ == "__main__":
    key = jax.random.PRNGKey(0)
    k_x, k_s, k_w = jax.random.split(key, 3)

    N, C_in, H, W = 2, 4, 8, 8
    C_out = 8
    C_skip = 8  # typical UNet skip carries out_size channels

    x = jax.random.normal(k_x, (N, C_in, H, W), jnp.float32)
    skip = jax.random.normal(k_s, (N, C_skip, 2 * H, 2 * W), jnp.float32)
    # Deterministic synthetic ConvTranspose2d weight: (in, out, kH, kW), bias=False.
    weight = 0.1 * jax.random.normal(k_w, (C_in, C_out, 4, 4), jnp.float32)
    # TODO(synk): Dropout branch of the module is inactive (dropout=0.0 default), not implemented.

    # The kernel runs its matmuls in bf16 (f32 accumulation); quantize both
    # paths identically so the check isolates kernel math, not bf16 rounding.
    x_q = x.astype(jnp.bfloat16).astype(jnp.float32)
    w_q = weight.astype(jnp.bfloat16).astype(jnp.float32)

    out = jax.block_until_ready(unet_up_forward(x_q, skip, w_q))
    assert out.shape == (N, C_out + C_skip, 2 * H, 2 * W), out.shape

    ref = jax.block_until_ready(_reference_forward(x_q, skip, w_q))
    assert jnp.allclose(out, ref, rtol=1e-4, atol=1e-4), \
        float(jnp.max(jnp.abs(out - ref)))

    print("KERNEL_OK")
</pallas_src>

<mosaic_0001>
module attributes {stable_mosaic.version = 11 : i64} {
  func.func @_unet_up_kernel(%arg0: i32, %arg1: memref<1x10x10x4xbf16, #tpu.memory_space<vmem>>, %arg2: memref<4x16x8xbf16, #tpu.memory_space<vmem>>, %arg3: memref<1x64x32xf32, #tpu.memory_space<vmem>>, %arg4: memref<64x32xf32, #tpu.memory_space<vmem>>) attributes {dimension_semantics = [#tpu.dimension_semantics<parallel>], iteration_bounds = array<i64: 2>, scalar_prefetch = 0 : i64, scratch_operands = 1 : i64, tpu.core_type = #tpu.core_type<tc>, window_params = [{transform_indices = @transform_0, window_bounds = array<i64: 1, 10, 10, 4>}, {pipeline_mode = #tpu.pipeline_mode<synchronous>, transform_indices = @transform_1, window_bounds = array<i64: 4, 16, 8>}, {transform_indices = @transform_2, window_bounds = array<i64: 1, 64, 32>}]} {
    %cst = arith.constant 0.000000e+00 : f32
    %0 = vector.broadcast %cst : f32 to vector<1x8xf32>
    %cst_0 = arith.constant 0.000000e+00 : f32
    %1 = vector.broadcast %cst_0 : f32 to vector<1x8xf32>
    %c0 = arith.constant 0 : index
    %c1 = arith.constant 1 : index
    %c1_1 = arith.constant 1 : index
    %c0_2 = arith.constant 0 : index
    %2 = vector.load %arg1[%c0, %c1, %c1_1, %c0_2] : memref<1x10x10x4xbf16, #tpu.memory_space<vmem>>, vector<1x8x8x4xbf16>
    %3 = vector.shape_cast %2 : vector<1x8x8x4xbf16> to vector<8x8x4xbf16>
    %4 = vector.shape_cast %3 : vector<8x8x4xbf16> to vector<64x4xbf16>
    %c0_3 = arith.constant 0 : index
    %c1_4 = arith.constant 1 : index
    %c0_5 = arith.constant 0 : index
    %c0_6 = arith.constant 0 : index
    %5 = vector.load %arg1[%c0_3, %c1_4, %c0_5, %c0_6] : memref<1x10x10x4xbf16, #tpu.memory_space<vmem>>, vector<1x8x8x4xbf16>
    %6 = vector.shape_cast %5 : vector<1x8x8x4xbf16> to vector<8x8x4xbf16>
    %7 = vector.shape_cast %6 : vector<8x8x4xbf16> to vector<64x4xbf16>
    %c0_7 = arith.constant 0 : index
    %c0_8 = arith.constant 0 : index
    %c1_9 = arith.constant 1 : index
    %c0_10 = arith.constant 0 : index
    %8 = vector.load %arg1[%c0_7, %c0_8, %c1_9, %c0_10] : memref<1x10x10x4xbf16, #tpu.memory_space<vmem>>, vector<1x8x8x4xbf16>
    %9 = vector.shape_cast %8 : vector<1x8x8x4xbf16> to vector<8x8x4xbf16>
    %10 = vector.shape_cast %9 : vector<8x8x4xbf16> to vector<64x4xbf16>
    %c0_11 = arith.constant 0 : index
    %c0_12 = arith.constant 0 : index
    %c0_13 = arith.constant 0 : index
    %c0_14 = arith.constant 0 : index
    %11 = vector.load %arg1[%c0_11, %c0_12, %c0_13, %c0_14] : memref<1x10x10x4xbf16, #tpu.memory_space<vmem>>, vector<1x8x8x4xbf16>
    %12 = vector.shape_cast %11 : vector<1x8x8x4xbf16> to vector<8x8x4xbf16>
    %13 = vector.shape_cast %12 : vector<8x8x4xbf16> to vector<64x4xbf16>
    %14 = tpu.concatenate %4, %7, %10, %13 in 1 : vector<64x4xbf16>, vector<64x4xbf16>, vector<64x4xbf16>, vector<64x4xbf16> -> vector<64x16xbf16>
    %c0_15 = arith.constant 0 : index
    %c0_16 = arith.constant 0 : index
    %c0_17 = arith.constant 0 : index
    %15 = vector.load %arg2[%c0_15, %c0_16, %c0_17] : memref<4x16x8xbf16, #tpu.memory_space<vmem>>, vector<1x16x8xbf16>
    %16 = vector.shape_cast %15 : vector<1x16x8xbf16> to vector<16x8xbf16>
    %cst_18 = arith.constant dense<0.000000e+00> : vector<64x8xf32>
    %17 = tpu.matmul %14, %16, %cst_18 {dimension_numbers = #tpu.dot_dimension_numbers<[1], [0], [0], [1], [0, 0, 1, 1], [], []>} : vector<64x16xbf16>, vector<16x8xbf16>, vector<64x8xf32> -> vector<64x8xf32>
    %cst_19 = arith.constant dense<0.000000e+00> : vector<8xf32>
    %18 = vector.multi_reduction <add>, %17, %cst_19 [0] : vector<64x8xf32> to vector<8xf32>
    %19 = vector.shape_cast %18 : vector<8xf32> to vector<1x8xf32>
    %20 = arith.addf %0, %19 : vector<1x8xf32>
    %21 = arith.mulf %17, %17 : vector<64x8xf32>
    %cst_20 = arith.constant dense<0.000000e+00> : vector<8xf32>
    %22 = vector.multi_reduction <add>, %21, %cst_20 [0] : vector<64x8xf32> to vector<8xf32>
    %23 = vector.shape_cast %22 : vector<8xf32> to vector<1x8xf32>
    %24 = arith.addf %1, %23 : vector<1x8xf32>
    %c0_21 = arith.constant 0 : index
    %c0_22 = arith.constant 0 : index
    %25 = vector.load %arg4[%c0_21, %c0_22] : memref<64x32xf32, #tpu.memory_space<vmem>>, vector<64x8xf32>
    tpu.vector_store %arg4[%c0_21, %c0_22], %17 {strides = array<i32>} : memref<64x32xf32, #tpu.memory_space<vmem>>, vector<64x8xf32>,
    %c0_23 = arith.constant 0 : index
    %c1_24 = arith.constant 1 : index
    %c2 = arith.constant 2 : index
    %c0_25 = arith.constant 0 : index
    %26 = vector.load %arg1[%c0_23, %c1_24, %c2, %c0_25] : memref<1x10x10x4xbf16, #tpu.memory_space<vmem>>, vector<1x8x8x4xbf16>
    %27 = vector.shape_cast %26 : vector<1x8x8x4xbf16> to vector<8x8x4xbf16>
    %28 = vector.shape_cast %27 : vector<8x8x4xbf16> to vector<64x4xbf16>
    %c0_26 = arith.constant 0 : index
    %c0_27 = arith.constant 0 : index
    %c2_28 = arith.constant 2 : index
    %c0_29 = arith.constant 0 : index
    %29 = vector.load %arg1[%c0_26, %c0_27, %c2_28, %c0_29] : memref<1x10x10x4xbf16, #tpu.memory_space<vmem>>, vector<1x8x8x4xbf16>
    %30 = vector.shape_cast %29 : vector<1x8x8x4xbf16> to vector<8x8x4xbf16>
    %31 = vector.shape_cast %30 : vector<8x8x4xbf16> to vector<64x4xbf16>
    %32 = tpu.concatenate %4, %28, %10, %31 in 1 : vector<64x4xbf16>, vector<64x4xbf16>, vector<64x4xbf16>, vector<64x4xbf16> -> vector<64x16xbf16>
    %c1_30 = arith.constant 1 : index
    %c0_31 = arith.constant 0 : index
    %c0_32 = arith.constant 0 : index
    %33 = vector.load %arg2[%c1_30, %c0_31, %c0_32] : memref<4x16x8xbf16, #tpu.memory_space<vmem>>, vector<1x16x8xbf16>
    %34 = vector.shape_cast %33 : vector<1x16x8xbf16> to vector<16x8xbf16>
    %cst_33 = arith.constant dense<0.000000e+00> : vector<64x8xf32>
    %35 = tpu.matmul %32, %34, %cst_33 {dimension_numbers = #tpu.dot_dimension_numbers<[1], [0], [0], [1], [0, 0, 1, 1], [], []>} : vector<64x16xbf16>, vector<16x8xbf16>, vector<64x8xf32> -> vector<64x8xf32>
    %cst_34 = arith.constant dense<0.000000e+00> : vector<8xf32>
    %36 = vector.multi_reduction <add>, %35, %cst_34 [0] : vector<64x8xf32> to vector<8xf32>
    %37 = vector.shape_cast %36 : vector<8xf32> to vector<1x8xf32>
    %38 = arith.addf %20, %37 : vector<1x8xf32>
    %39 = arith.mulf %35, %35 : vector<64x8xf32>
    %cst_35 = arith.constant dense<0.000000e+00> : vector<8xf32>
    %40 = vector.multi_reduction <add>, %39, %cst_35 [0] : vector<64x8xf32> to vector<8xf32>
    %41 = vector.shape_cast %40 : vector<8xf32> to vector<1x8xf32>
    %42 = arith.addf %24, %41 : vector<1x8xf32>
    %c0_36 = arith.constant 0 : index
    %c8 = arith.constant 8 : index
    %43 = vector.load %arg4[%c0_36, %c8] : memref<64x32xf32, #tpu.memory_space<vmem>>, vector<64x8xf32>
    tpu.vector_store %arg4[%c0_36, %c8], %35 {strides = array<i32>} : memref<64x32xf32, #tpu.memory_space<vmem>>, vector<64x8xf32>,
    %c0_37 = arith.constant 0 : index
    %c2_38 = arith.constant 2 : index
    %c1_39 = arith.constant 1 : index
    %c0_40 = arith.constant 0 : index
    %44 = vector.load %arg1[%c0_37, %c2_38, %c1_39, %c0_40] : memref<1x10x10x4xbf16, #tpu.memory_space<vmem>>, vector<1x8x8x4xbf16>
    %45 = vector.shape_cast %44 : vector<1x8x8x4xbf16> to vector<8x8x4xbf16>
    %46 = vector.shape_cast %45 : vector<8x8x4xbf16> to vector<64x4xbf16>
    %c0_41 = arith.constant 0 : index
    %c2_42 = arith.constant 2 : index
    %c0_43 = arith.constant 0 : index
    %c0_44 = arith.constant 0 : index
    %47 = vector.load %arg1[%c0_41, %c2_42, %c0_43, %c0_44] : memref<1x10x10x4xbf16, #tpu.memory_space<vmem>>, vector<1x8x8x4xbf16>
    %48 = vector.shape_cast %47 : vector<1x8x8x4xbf16> to vector<8x8x4xbf16>
    %49 = vector.shape_cast %48 : vector<8x8x4xbf16> to vector<64x4xbf16>
    %50 = tpu.concatenate %4, %7, %46, %49 in 1 : vector<64x4xbf16>, vector<64x4xbf16>, vector<64x4xbf16>, vector<64x4xbf16> -> vector<64x16xbf16>
    %c2_45 = arith.constant 2 : index
    %c0_46 = arith.constant 0 : index
    %c0_47 = arith.constant 0 : index
    %51 = vector.load %arg2[%c2_45, %c0_46, %c0_47] : memref<4x16x8xbf16, #tpu.memory_space<vmem>>, vector<1x16x8xbf16>
    %52 = vector.shape_cast %51 : vector<1x16x8xbf16> to vector<16x8xbf16>
    %cst_48 = arith.constant dense<0.000000e+00> : vector<64x8xf32>
    %53 = tpu.matmul %50, %52, %cst_48 {dimension_numbers = #tpu.dot_dimension_numbers<[1], [0], [0], [1], [0, 0, 1, 1], [], []>} : vector<64x16xbf16>, vector<16x8xbf16>, vector<64x8xf32> -> vector<64x8xf32>
    %cst_49 = arith.constant dense<0.000000e+00> : vector<8xf32>
    %54 = vector.multi_reduction <add>, %53, %cst_49 [0] : vector<64x8xf32> to vector<8xf32>
    %55 = vector.shape_cast %54 : vector<8xf32> to vector<1x8xf32>
    %56 = arith.addf %38, %55 : vector<1x8xf32>
    %57 = arith.mulf %53, %53 : vector<64x8xf32>
    %cst_50 = arith.constant dense<0.000000e+00> : vector<8xf32>
    %58 = vector.multi_reduction <add>, %57, %cst_50 [0] : vector<64x8xf32> to vector<8xf32>
    %59 = vector.shape_cast %58 : vector<8xf32> to vector<1x8xf32>
    %60 = arith.addf %42, %59 : vector<1x8xf32>
    %c0_51 = arith.constant 0 : index
    %c16 = arith.constant 16 : index
    %61 = vector.load %arg4[%c0_51, %c16] : memref<64x32xf32, #tpu.memory_space<vmem>>, vector<64x8xf32>
    tpu.vector_store %arg4[%c0_51, %c16], %53 {strides = array<i32>} : memref<64x32xf32, #tpu.memory_space<vmem>>, vector<64x8xf32>,
    %c0_52 = arith.constant 0 : index
    %c2_53 = arith.constant 2 : index
    %c2_54 = arith.constant 2 : index
    %c0_55 = arith.constant 0 : index
    %62 = vector.load %arg1[%c0_52, %c2_53, %c2_54, %c0_55] : memref<1x10x10x4xbf16, #tpu.memory_space<vmem>>, vector<1x8x8x4xbf16>
    %63 = vector.shape_cast %62 : vector<1x8x8x4xbf16> to vector<8x8x4xbf16>
    %64 = vector.shape_cast %63 : vector<8x8x4xbf16> to vector<64x4xbf16>
    %65 = tpu.concatenate %4, %28, %46, %64 in 1 : vector<64x4xbf16>, vector<64x4xbf16>, vector<64x4xbf16>, vector<64x4xbf16> -> vector<64x16xbf16>
    %c3 = arith.constant 3 : index
    %c0_56 = arith.constant 0 : index
    %c0_57 = arith.constant 0 : index
    %66 = vector.load %arg2[%c3, %c0_56, %c0_57] : memref<4x16x8xbf16, #tpu.memory_space<vmem>>, vector<1x16x8xbf16>
    %67 = vector.shape_cast %66 : vector<1x16x8xbf16> to vector<16x8xbf16>
    %cst_58 = arith.constant dense<0.000000e+00> : vector<64x8xf32>
    %68 = tpu.matmul %65, %67, %cst_58 {dimension_numbers = #tpu.dot_dimension_numbers<[1], [0], [0], [1], [0, 0, 1, 1], [], []>} : vector<64x16xbf16>, vector<16x8xbf16>, vector<64x8xf32> -> vector<64x8xf32>
    %cst_59 = arith.constant dense<0.000000e+00> : vector<8xf32>
    %69 = vector.multi_reduction <add>, %68, %cst_59 [0] : vector<64x8xf32> to vector<8xf32>
    %70 = vector.shape_cast %69 : vector<8xf32> to vector<1x8xf32>
    %71 = arith.addf %56, %70 : vector<1x8xf32>
    %72 = arith.mulf %68, %68 : vector<64x8xf32>
    %cst_60 = arith.constant dense<0.000000e+00> : vector<8xf32>
    %73 = vector.multi_reduction <add>, %72, %cst_60 [0] : vector<64x8xf32> to vector<8xf32>
    %74 = vector.shape_cast %73 : vector<8xf32> to vector<1x8xf32>
    %75 = arith.addf %60, %74 : vector<1x8xf32>
    %c0_61 = arith.constant 0 : index
    %c24 = arith.constant 24 : index
    %76 = vector.load %arg4[%c0_61, %c24] : memref<64x32xf32, #tpu.memory_space<vmem>>, vector<64x8xf32>
    tpu.vector_store %arg4[%c0_61, %c24], %68 {strides = array<i32>} : memref<64x32xf32, #tpu.memory_space<vmem>>, vector<64x8xf32>,
    %cst_62 = arith.constant 2.560000e+02 : f32
    %77 = vector.broadcast %cst_62 : f32 to vector<1x8xf32>
    %78 = arith.divf %71, %77 : vector<1x8xf32>
    %cst_63 = arith.constant 2.560000e+02 : f32
    %79 = vector.broadcast %cst_63 : f32 to vector<1x8xf32>
    %80 = arith.divf %75, %79 : vector<1x8xf32>
    %81 = arith.mulf %78, %78 : vector<1x8xf32>
    %82 = arith.subf %80, %81 : vector<1x8xf32>
    %cst_64 = arith.constant 0.000000e+00 : f32
    %83 = vector.broadcast %cst_64 : f32 to vector<1x8xf32>
    %84 = arith.maximumf %82, %83 : vector<1x8xf32>
    %cst_65 = arith.constant 9.99999974E-6 : f32
    %85 = vector.broadcast %cst_65 : f32 to vector<1x8xf32>
    %86 = arith.addf %84, %85 : vector<1x8xf32>
    %87 = math.rsqrt %86 : vector<1x8xf32>
    %88 = tpu.concatenate %78, %78, %78, %78 in 1 : vector<1x8xf32>, vector<1x8xf32>, vector<1x8xf32>, vector<1x8xf32> -> vector<1x32xf32>
    %89 = tpu.concatenate %87, %87, %87, %87 in 1 : vector<1x8xf32>, vector<1x8xf32>, vector<1x8xf32>, vector<1x8xf32> -> vector<1x32xf32>
    %c0_66 = arith.constant 0 : index
    %c0_67 = arith.constant 0 : index
    %90 = vector.load %arg4[%c0_66, %c0_67] : memref<64x32xf32, #tpu.memory_space<vmem>>, vector<64x32xf32>
    %91 = vector.broadcast %88 : vector<1x32xf32> to vector<64x32xf32>
    %92 = arith.subf %90, %91 : vector<64x32xf32>
    %93 = vector.broadcast %89 : vector<1x32xf32> to vector<64x32xf32>
    %94 = arith.mulf %92, %93 : vector<64x32xf32>
    %cst_68 = arith.constant 0.000000e+00 : f32
    %95 = vector.broadcast %cst_68 : f32 to vector<64x32xf32>
    %96 = arith.maximumf %94, %95 : vector<64x32xf32>
    %c0_69 = arith.constant 0 : index
    %c0_70 = arith.constant 0 : index
    %c0_71 = arith.constant 0 : index
    %97 = vector.load %arg3[%c0_69, %c0_70, %c0_71] : memref<1x64x32xf32, #tpu.memory_space<vmem>>, vector<1x64x32xf32>
    %98 = vector.shape_cast %97 : vector<1x64x32xf32> to vector<64x32xf32>
    %99 = vector.shape_cast %96 : vector<64x32xf32> to vector<1x64x32xf32>
    tpu.vector_store %arg3[%c0_69, %c0_70, %c0_71], %99 {strides = array<i32>} : memref<1x64x32xf32, #tpu.memory_space<vmem>>, vector<1x64x32xf32>,
    return
  }
  func.func @transform_0(%arg0: i32) -> (i32, i32, i32, i32) {
    %c0_i32 = arith.constant 0 : i32
    %c0_i32_0 = arith.constant 0 : i32
    %c0_i32_1 = arith.constant 0 : i32
    %c0_i32_2 = arith.constant 0 : i32
    return %arg0, %c0_i32, %c0_i32_0, %c0_i32_1 : i32, i32, i32, i32
  }
  func.func @transform_1(%arg0: i32) -> (i32, i32, i32) {
    %c0_i32 = arith.constant 0 : i32
    %c0_i32_0 = arith.constant 0 : i32
    %c0_i32_1 = arith.constant 0 : i32
    %c0_i32_2 = arith.constant 0 : i32
    return %c0_i32, %c0_i32_0, %c0_i32_1 : i32, i32, i32
  }
  func.func @transform_2(%arg0: i32) -> (i32, i32, i32) {
    %c0_i32 = arith.constant 0 : i32
    %c0_i32_0 = arith.constant 0 : i32
    %c0_i32_1 = arith.constant 0 : i32
    return %arg0, %c0_i32, %c0_i32_0 : i32, i32, i32
  }
}

</mosaic_0001>

<llo_original>
// kernel: tpu_custom_call.1
$region0: #{tpu_custom_call.1}
  #allocation0 [shape = 'u32[]', space=smem, size = 0x4, offset = 0x4, fixed_abs, tag = 'smem constant byte address 0x4 - core index']
  #allocation1 [shape = 'u32[144,128]{1,0:T(1,128)}', space=vmem, size = 0x12000, scoped, tag = 'internal scratch']
  #allocation2 [shape = 'f32[64,32]{1,0:T(8,128)}', space=vmem, size = 0x8000, scoped, tag = 'scratch operand']
  %s0 = inlined_call_operand.vmem [shape: bf16[2,10,10,4], index: 0, kind: input, shape index: {}]
  %s1 = inlined_call_operand.vmem [shape: bf16[4,16,8], index: 1, kind: input, shape index: {}]
  %s2 = inlined_call_operand.vmem [shape: f32[2,64,32], index: 2, kind: output, shape index: {}]
  %s3 = sld [smem:[#allocation0]]
  $region41: #{tpu_custom_call.1} parent=0
    _
  %s5 = ssub.s32 1, %s3
  %s6 = scalar_select 0, %s5, %s3
  loop: start=0, step=1, limit=4
  $region2: #{tpu_custom_call.1} parent=0 // loop_pre_header
    _
  $region3: #{tpu_custom_call.1} parent=0 // loop_header
    %s8 = sphi 0, %s12
    %p9 = scmp.ge.s32.totalorder %s8, 4
    %s18 = sphi 0, %s20
    %s21 = sphi 0, %s18
    %s22 = sphi 0, %s21
    %s38 = sphi 0, %s22
    %s42 = sphi 0, %s42
    %s44 = sphi 0, %s42
    %s45 = sphi 0, %s44
    %s59 = sphi 0, %s45
    %s65 = sphi 0, %s67
    %s68 = sphi 0, %s65
    %s69 = sphi 0, %s68
    %s85 = sphi 0, %s69
  $region4: #{tpu_custom_call.1} parent=0 // loop_header_branch
    %11 = sbr.rel (%p9) target = $region8
  $region5: #{tpu_custom_call.1} parent=0 // loop_body
    %s13 = ssub.s32 %s8, 1
    %s14 = ssub.s32 %s8, 2
    %s15 = sadd.s32 %s8, 1
    %s16 = ssub.s32 %s8, %s15
    %p17 = scmp.eq.s32.totalorder %s16, 0
    %s19 = sadd.s32 %s18, 1
    %s20 = scalar_select %p17, %s18, %s19
    %p23 = pneg %p17
    %p24 = scmp.eq.s32.totalorder %s8, 1
    %p25 = por %p23, %p24
    %p26 = scmp.ne.s32.totalorder %s18, %s21
    %p27 = scmp.eq.s32.totalorder %s8, 0
    %p28 = por %p26, %p27
    %p29 = scmp.ne.s32.totalorder %s18, %s21
    %p30 = scmp.eq.s32.totalorder %s13, 1
    %p31 = por %p29, %p30
    %p32 = scmp.ne.s32.totalorder %s21, %s22
    %p33 = scmp.eq.s32.totalorder %s13, 0
    %p34 = por %p32, %p33
    %p35 = scmp.ne.s32.totalorder %s21, %s22
    %p36 = scmp.eq.s32.totalorder %s14, 1
    %p37 = por %p35, %p36
    %p39 = scmp.ne.s32.totalorder %s22, %s38
    %p40 = scmp.eq.s32.totalorder %s14, 0
    %p41 = por %p39, %p40
    %s43 = sadd.s32 %s42, 1
    %p46 = scmp.eq.s32.totalorder %s8, 1
    %p47 = scmp.ne.s32.totalorder %s42, %s44
    %p48 = scmp.eq.s32.totalorder %s8, 0
    %p49 = por %p47, %p48
    %p50 = scmp.ne.s32.totalorder %s42, %s44
    %p51 = scmp.eq.s32.totalorder %s13, 1
    %p52 = por %p50, %p51
    %p53 = scmp.ne.s32.totalorder %s44, %s45
    %p54 = scmp.eq.s32.totalorder %s13, 0
    %p55 = por %p53, %p54
    %p56 = scmp.ne.s32.totalorder %s44, %s45
    %p57 = scmp.eq.s32.totalorder %s14, 1
    %p58 = por %p56, %p57
    %p60 = scmp.ne.s32.totalorder %s45, %s59
    %p61 = scmp.eq.s32.totalorder %s14, 0
    %p62 = por %p60, %p61
    %s63 = ssub.s32 %s8, %s15
    %p64 = scmp.eq.s32.totalorder %s63, 0
    %s66 = sadd.s32 %s65, 1
    %s67 = scalar_select %p64, %s65, %s66
    %p70 = pneg %p64
    %p71 = scmp.eq.s32.totalorder %s8, 1
    %p72 = por %p70, %p71
    %p73 = scmp.ne.s32.totalorder %s65, %s68
    %p74 = scmp.eq.s32.totalorder %s8, 0
    %p75 = por %p73, %p74
    %p76 = scmp.ne.s32.totalorder %s65, %s68
    %p77 = scmp.eq.s32.totalorder %s13, 1
    %p78 = por %p76, %p77
    %p79 = scmp.ne.s32.totalorder %s68, %s69
    %p80 = scmp.eq.s32.totalorder %s13, 0
    %p81 = por %p79, %p80
    %p82 = scmp.ne.s32.totalorder %s68, %s69
    %p83 = scmp.eq.s32.totalorder %s14, 1
    %p84 = por %p82, %p83
    %p86 = scmp.ne.s32.totalorder %s69, %s85
    %p87 = scmp.eq.s32.totalorder %s14, 0
    %p88 = por %p86, %p87
    %p89 = scmp.le.s32.totalorder 1, %s8
    %p90 = scmp.lt.s32.totalorder %s8, 3
    %p91 = pnand %p89, %p90
    %p92 = pneg %p91
    // Predicated region
    $region9: #{tpu_custom_call.1} parent=5 // pred_check
      _
    $region10: #{tpu_custom_call.1} parent=5 // pred_check_branch
      %94 = sbr.rel (%p91) target = $region12
    $region11: #{tpu_custom_call.1} parent=5 // pred_region
      %s95 = ssub.s32 %s8, 1
      // Predicated region
      $region13: #{tpu_custom_call.1} parent=11 // pred_check
        %p96 = pneg %p55
      $region14: #{tpu_custom_call.1} parent=11 // pred_check_branch
        %98 = sbr.rel (%p96) target = $region16
      $region15: #{tpu_custom_call.1} parent=11 // pred_region
        _
      $region16: #{tpu_custom_call.1} parent=11 // pred_fallthru
        _
    $region12: #{tpu_custom_call.1} parent=5 // pred_fallthru
      _
    %p99 = scmp.lt.s32.totalorder %s8, 2
    // Predicated region
    $region17: #{tpu_custom_call.1} parent=5 // pred_check
      %p100 = pneg %p99
    $region18: #{tpu_custom_call.1} parent=5 // pred_check_branch
      %102 = sbr.rel (%p100) target = $region20
    $region19: #{tpu_custom_call.1} parent=5 // pred_region
      // Predicated region
      $region21: #{tpu_custom_call.1} parent=19 // pred_check
        %p103 = pneg %p28
      $region22: #{tpu_custom_call.1} parent=19 // pred_check_branch
        %105 = sbr.rel (%p103) target = $region24
      $region23: #{tpu_custom_call.1} parent=19 // pred_region
        %p106 = scmp.lt.s32.totalorder %s8, 1
        %s107 = scalar_select %p106, %s8, 1
        %s108 = smul.addr %s107, 20
        %s109 = smul.addr %s108, 4
        %s110 = scalar_lea.vmem %s0, %s109
      $region24: #{tpu_custom_call.1} parent=19 // pred_fallthru
        _
    $region20: #{tpu_custom_call.1} parent=5 // pred_fallthru
      _
    %p111 = scmp.le.s32.totalorder 1, %s8
    %p112 = scmp.lt.s32.totalorder %s8, 3
    %p113 = pnand %p111, %p112
    %p114 = pneg %p113
    // Predicated region
    $region25: #{tpu_custom_call.1} parent=5 // pred_check
      _
    $region26: #{tpu_custom_call.1} parent=5 // pred_check_branch
      %116 = sbr.rel (%p113) target = $region28
    $region27: #{tpu_custom_call.1} parent=5 // pred_region
      %s117 = ssub.s32 %s8, 1
      %p118 = scmp.lt.s32.totalorder %s13, 1
      %s119 = scalar_select %p118, %s13, 1
      %s120 = smul.addr %s119, 20
      %s121 = smul.addr %s120, 4
      %s122 = scalar_lea.vmem %s0, %s121
      %p123 = pneg %p34
      %p124 = pneg %p31
      %p125 = pneg %p55
      %p126 = pneg %p52
      %p127 = pneg %p81
      %p128 = pneg %p78
      %p129 = scmp.lt.s32.totalorder %s13, 1
      %s130 = scalar_select %p129, %s13, 1
      %s131 = smul.addr %s130, 8
      %s132 = smul.addr %s131, 8
      %s133 = scalar_lea.vmem %s2, %s132
      %p134 = scmp.lt.s32.totalorder %s13, 1
      %s135 = scalar_select %p134, %s13, 1
      %s136 = smul.addr %s135, 20
      %s137 = smul.addr %s136, 4
      %s138 = scalar_lea.vmem %s0, %s137
      %p139 = scmp.lt.s32.totalorder %s13, 1
      %s140 = scalar_select %p139, %s13, 1
      %s141 = smul.addr %s140, 8
      %s142 = smul.addr %s141, 8
      %s143 = scalar_lea.vmem %s2, %s142
      %s145 = scalar_lea.vmem %s138, 8
      %v146 = vld [vmem:[%s145] sm:$0xf]
      %v147 = vld [vmem:[%s145 + $0x4] sm:$0x1]
      %v148 = vld [vmem:[%s145 + $0x8] sm:$0xf]
      %v149 = vld [vmem:[%s145 + $0xc] sm:$0x1]
      %v150 = vld [vmem:[%s145 + $0x10] sm:$0xf]
      %v151 = vld [vmem:[%s145 + $0x14] sm:$0x1]
      %v152 = vld [vmem:[%s145 + $0x18] sm:$0xf]
      %v153 = vld [vmem:[%s145 + $0x1c] sm:$0x1]
      %v154 = vld [vmem:[%s145 + $0x20] sm:$0xf]
      %v155 = vld [vmem:[%s145 + $0x24] sm:$0x1]
      %v156 = vld [vmem:[%s145 + $0x28] sm:$0xf]
      %v157 = vld [vmem:[%s145 + $0x2c] sm:$0x1]
      %v158 = vld [vmem:[%s145 + $0x30] sm:$0xf]
      %v159 = vld [vmem:[%s145 + $0x34] sm:$0x1]
      %v160 = vld [vmem:[%s145 + $0x38] sm:$0xf]
      %v161 = vld [vmem:[%s145 + $0x3c] sm:$0x1]
      %vm162 = vsmask.f32 3328
      %vm163 = vsmask.f32 7440
      %vm164 = vmor %vm162, %vm163
      %v166 = vshrl.u32 %v146, 16
      %v168 = vrot.slane %v166, 4
      %v169 = vshll.u32 %v146, 16
      %v171 = vrot.slane %v169, 5
      %v172 = vor.u32 %v168, %v171
      %v173 = vrot.slane %v172, 4
      %v175 = vshll.u32 %v147, 16
      %v177 = vrot.slane %v175, 5
      %v178 = vsel %vm164, %v173, %v177
      %v180 = vshrl.u32 %v148, 16
      %v182 = vrot.slane %v180, 4
      %v183 = vshll.u32 %v148, 16
      %v185 = vrot.slane %v183, 5
      %v186 = vor.u32 %v182, %v185
      %v187 = vrot.slane %v186, 4
      %v189 = vshll.u32 %v149, 16
      %v191 = vrot.slane %v189, 5
      %v192 = vsel %vm164, %v187, %v191
      %v194 = vshrl.u32 %v150, 16
      %v196 = vrot.slane %v194, 4
      %v197 = vshll.u32 %v150, 16
      %v199 = vrot.slane %v197, 5
      %v200 = vor.u32 %v196, %v199
      %v201 = vrot.slane %v200, 4
      %v203 = vshll.u32 %v151, 16
      %v205 = vrot.slane %v203, 5
      %v206 = vsel %vm164, %v201, %v205
      %v208 = vshrl.u32 %v152, 16
      %v210 = vrot.slane %v208, 4
      %v211 = vshll.u32 %v152, 16
      %v213 = vrot.slane %v211, 5
      %v214 = vor.u32 %v210, %v213
      %v215 = vrot.slane %v214, 4
      %v217 = vshll.u32 %v153, 16
      %v219 = vrot.slane %v217, 5
      %v220 = vsel %vm164, %v215, %v219
      %v222 = vshrl.u32 %v154, 16
      %v224 = vrot.slane %v222, 4
      %v225 = vshll.u32 %v154, 16
      %v227 = vrot.slane %v225, 5
      %v228 = vor.u32 %v224, %v227
      %v229 = vrot.slane %v228, 4
      %v231 = vshll.u32 %v155, 16
      %v233 = vrot.slane %v231, 5
      %v234 = vsel %vm164, %v229, %v233
      %v236 = vshrl.u32 %v156, 16
      %v238 = vrot.slane %v236, 4
      %v239 = vshll.u32 %v156, 16
      %v241 = vrot.slane %v239, 5
      %v242 = vor.u32 %v238, %v241
      %v243 = vrot.slane %v242, 4
      %v245 = vshll.u32 %v157, 16
      %v247 = vrot.slane %v245, 5
      %v248 = vsel %vm164, %v243, %v247
      %v250 = vshrl.u32 %v158, 16
      %v252 = vrot.slane %v250, 4
      %v253 = vshll.u32 %v158, 16
      %v255 = vrot.slane %v253, 5
      %v256 = vor.u32 %v252, %v255
      %v257 = vrot.slane %v256, 4
      %v259 = vshll.u32 %v159, 16
      %v261 = vrot.slane %v259, 5
      %v262 = vsel %vm164, %v257, %v261
      %v264 = vshrl.u32 %v160, 16
      %v266 = vrot.slane %v264, 4
      %v267 = vshll.u32 %v160, 16
      %v269 = vrot.slane %v267, 5
      %v270 = vor.u32 %v266, %v269
      %v271 = vrot.slane %v270, 4
      %v273 = vshll.u32 %v161, 16
      %v275 = vrot.slane %v273, 5
      %v276 = vsel %vm164, %v271, %v275
      %v277 = vld [vmem:[%s138] sm:$0xf]
      %v278 = vld [vmem:[%s138 + $0x4] sm:$0x1]
      %v279 = vld [vmem:[%s138 + $0x8] sm:$0xf]
      %v280 = vld [vmem:[%s138 + $0xc] sm:$0x1]
      %v281 = vld [vmem:[%s138 + $0x10] sm:$0xf]
      %v282 = vld [vmem:[%s138 + $0x14] sm:$0x1]
      %v283 = vld [vmem:[%s138 + $0x18] sm:$0xf]
      %v284 = vld [vmem:[%s138 + $0x1c] sm:$0x1]
      %v285 = vld [vmem:[%s138 + $0x20] sm:$0xf]
      %v286 = vld [vmem:[%s138 + $0x24] sm:$0x1]
      %v287 = vld [vmem:[%s138 + $0x28] sm:$0xf]
      %v288 = vld [vmem:[%s138 + $0x2c] sm:$0x1]
      %v289 = vld [vmem:[%s138 + $0x30] sm:$0xf]
      %v290 = vld [vmem:[%s138 + $0x34] sm:$0x1]
      %v291 = vld [vmem:[%s138 + $0x38] sm:$0xf]
      %v292 = vld [vmem:[%s138 + $0x3c] sm:$0x1]
      %v294 = vshrl.u32 %v277, 16
      %v296 = vrot.slane %v294, 4
      %v297 = vshll.u32 %v277, 16
      %v299 = vrot.slane %v297, 5
      %v300 = vor.u32 %v296, %v299
      %v301 = vrot.slane %v300, 4
      %v303 = vshll.u32 %v278, 16
      %v305 = vrot.slane %v303, 5
      %v306 = vsel %vm164, %v301, %v305
      %v308 = vshrl.u32 %v279, 16
      %v310 = vrot.slane %v308, 4
      %v311 = vshll.u32 %v279, 16
      %v313 = vrot.slane %v311, 5
      %v314 = vor.u32 %v310, %v313
      %v315 = vrot.slane %v314, 4
      %v317 = vshll.u32 %v280, 16
      %v319 = vrot.slane %v317, 5
      %v320 = vsel %vm164, %v315, %v319
      %v322 = vshrl.u32 %v281, 16
      %v324 = vrot.slane %v322, 4
      %v325 = vshll.u32 %v281, 16
      %v327 = vrot.slane %v325, 5
      %v328 = vor.u32 %v324, %v327
      %v329 = vrot.slane %v328, 4
      %v331 = vshll.u32 %v282, 16
      %v333 = vrot.slane %v331, 5
      %v334 = vsel %vm164, %v329, %v333
      %v336 = vshrl.u32 %v283, 16
      %v338 = vrot.slane %v336, 4
      %v339 = vshll.u32 %v283, 16
      %v341 = vrot.slane %v339, 5
      %v342 = vor.u32 %v338, %v341
      %v343 = vrot.slane %v342, 4
      %v345 = vshll.u32 %v284, 16
      %v347 = vrot.slane %v345, 5
      %v348 = vsel %vm164, %v343, %v347
      %v350 = vshrl.u32 %v285, 16
      %v352 = vrot.slane %v350, 4
      %v353 = vshll.u32 %v285, 16
      %v355 = vrot.slane %v353, 5
      %v356 = vor.u32 %v352, %v355
      %v357 = vrot.slane %v356, 4
      %v359 = vshll.u32 %v286, 16
      %v361 = vrot.slane %v359, 5
      %v362 = vsel %vm164, %v357, %v361
      %v364 = vshrl.u32 %v287, 16
      %v366 = vrot.slane %v364, 4
      %v367 = vshll.u32 %v287, 16
      %v369 = vrot.slane %v367, 5
      %v370 = vor.u32 %v366, %v369
      %v371 = vrot.slane %v370, 4
      %v373 = vshll.u32 %v288, 16
      %v375 = vrot.slane %v373, 5
      %v376 = vsel %vm164, %v371, %v375
      %v378 = vshrl.u32 %v289, 16
      %v380 = vrot.slane %v378, 4
      %v381 = vshll.u32 %v289, 16
      %v383 = vrot.slane %v381, 5
      %v384 = vor.u32 %v380, %v383
      %v385 = vrot.slane %v384, 4
      %v387 = vshll.u32 %v290, 16
      %v389 = vrot.slane %v387, 5
      %v390 = vsel %vm164, %v385, %v389
      %v392 = vshrl.u32 %v291, 16
      %v394 = vrot.slane %v392, 4
      %v395 = vshll.u32 %v291, 16
      %v397 = vrot.slane %v395, 5
      %v398 = vor.u32 %v394, %v397
      %v399 = vrot.slane %v398, 4
      %v401 = vshll.u32 %v292, 16
      %v403 = vrot.slane %v401, 5
      %v404 = vsel %vm164, %v399, %v403
      %v405 = vunpack.c.l.b16 %v178
      %v406 = vunpack.c.l.b16 %v192
      %v407 = vunpack.c.l.b16 %v206
      %v408 = vunpack.c.l.b16 %v220
      %v409 = vunpack.c.l.b16 %v234
      %v410 = vunpack.c.l.b16 %v248
      %v411 = vunpack.c.l.b16 %v262
      %v412 = vunpack.c.l.b16 %v276
      %v413 = vpack.c.b16 %v406, %v405
      %v414 = vpack.c.b16 %v408, %v407
      %v415 = vpack.c.b16 %v410, %v409
      %v416 = vpack.c.b16 %v412, %v411
      %v425 = vunpack.c.l.b16 %v146
      %v426 = vunpack.c.l.b16 %v148
      %v427 = vunpack.c.l.b16 %v150
      %v428 = vunpack.c.l.b16 %v152
      %v429 = vunpack.c.l.b16 %v154
      %v430 = vunpack.c.l.b16 %v156
      %v431 = vunpack.c.l.b16 %v158
      %v432 = vunpack.c.l.b16 %v160
      %v433 = vpack.c.b16 %v426, %v425
      %v434 = vpack.c.b16 %v428, %v427
      %v435 = vpack.c.b16 %v430, %v429
      %v436 = vpack.c.b16 %v432, %v431
      %437 = vrot.lane.b32.xlu0 %v433, 4
      %v438 = vpop.permute.xlu0 %437
      %439 = vrot.lane.b32.xlu0 %v434, 4
      %v440 = vpop.permute.xlu0 %439
      %441 = vrot.lane.b32.xlu0 %v435, 4
      %v442 = vpop.permute.xlu0 %441
      %443 = vrot.lane.b32.xlu0 %v436, 4
      %v444 = vpop.permute.xlu0 %443
      %v445 = vunpack.c.l.b16 %v306
      %v446 = vunpack.c.l.b16 %v320
      %v447 = vunpack.c.l.b16 %v334
      %v448 = vunpack.c.l.b16 %v348
      %v449 = vunpack.c.l.b16 %v362
      %v450 = vunpack.c.l.b16 %v376
      %v451 = vunpack.c.l.b16 %v390
      %v452 = vunpack.c.l.b16 %v404
      %v453 = vpack.c.b16 %v446, %v445
      %v454 = vpack.c.b16 %v448, %v447
      %v455 = vpack.c.b16 %v450, %v449
      %v456 = vpack.c.b16 %v452, %v451
      %457 = vrot.lane.b32.xlu0 %v453, 8
      %v458 = vpop.permute.xlu0 %457
      %459 = vrot.lane.b32.xlu0 %v454, 8
      %v460 = vpop.permute.xlu0 %459
      %461 = vrot.lane.b32.xlu0 %v455, 8
      %v462 = vpop.permute.xlu0 %461
      %463 = vrot.lane.b32.xlu0 %v456, 8
      %v464 = vpop.permute.xlu0 %463
      %v473 = vunpack.c.l.b16 %v277
      %v474 = vunpack.c.l.b16 %v279
      %v475 = vunpack.c.l.b16 %v281
      %v476 = vunpack.c.l.b16 %v283
      %v477 = vunpack.c.l.b16 %v285
      %v478 = vunpack.c.l.b16 %v287
      %v479 = vunpack.c.l.b16 %v289
      %v480 = vunpack.c.l.b16 %v291
      %v481 = vpack.c.b16 %v474, %v473
      %v482 = vpack.c.b16 %v476, %v475
      %v483 = vpack.c.b16 %v478, %v477
      %v484 = vpack.c.b16 %v480, %v479
      %485 = vrot.lane.b32.xlu0 %v481, 12
      %v486 = vpop.permute.xlu0 %485
      %487 = vrot.lane.b32.xlu0 %v482, 12
      %v488 = vpop.permute.xlu0 %487
      %489 = vrot.lane.b32.xlu0 %v483, 12
      %v490 = vpop.permute.xlu0 %489
      %491 = vrot.lane.b32.xlu0 %v484, 12
      %v492 = vpop.permute.xlu0 %491
      %vm493 = vcmask 31744
      %v496 = vsel %vm493, %v413, %v438
      %v499 = vsel %vm493, %v414, %v440
      %v502 = vsel %vm493, %v415, %v442
      %v505 = vsel %vm493, %v416, %v444
      %vm506 = vcmask 64512
      %v508 = vsel %vm506, %v496, %v458
      %v510 = vsel %vm506, %v499, %v460
      %v512 = vsel %vm506, %v502, %v462
      %v514 = vsel %vm506, %v505, %v464
      %vm515 = vcmask 97280
      %v517 = vsel %vm515, %v508, %v486
      %v519 = vsel %vm515, %v510, %v488
      %v521 = vsel %vm515, %v512, %v490
      %v523 = vsel %vm515, %v514, %v492
      %v524 = vld [vmem:[%s1] sm:$0xf]
      %v525 = vld [vmem:[%s1 + $0x4] sm:$0xf]
      %v528 = vunpack.c.l.b16 %v524
      %v529 = vunpack.c.l.b16 %v525
      %v530 = vpack.c.b16 %v529, %v528
      %vm532 = vcmask 130048
      %v533 = vsel %vm532, %v517, 0
      %v535 = vsel %vm532, %v519, 0
      %v537 = vsel %vm532, %v521, 0
      %v539 = vsel %vm532, %v523, 0
      %541 = vmatprep.subr.bf16.mxu0 0
      %542 = vmatpush1.bf16.msra.mxu0 0
      %543 = vmatprep.subr.bf16.mxu0 0
      %544 = vmatpush1.bf16.msra.mxu0 0
      %545 = vmatprep.subr.bf16.mxu0 0
      %546 = vmatpush1.bf16.msra.mxu0 0
      %547 = vmatprep.subr.bf16.mxu0 0
      %548 = vmatpush1.bf16.msra.mxu0 0
      %549 = vmatprep.subr.bf16.mxu0 0
      %550 = vmatpush1.bf16.msra.mxu0 0
      %551 = vmatprep.subr.bf16.mxu0 0
      %552 = vmatpush1.bf16.msra.mxu0 0
      %553 = vmatprep.subr.bf16.mxu0 0
      %554 = vmatpush1.bf16.msra.mxu0 0
      %555 = vmatprep.subr.bf16.mxu0 0
      %556 = vmatpush1.bf16.msra.mxu0 %v530
      %557 = vmatprep.subr.bf16.mxu0 0
      %558 = vmatpush2.bf16.msra.mxu0 0
      %559 = vmatprep.subr.bf16.mxu0 0
      %560 = vmatpush2.bf16.msra.mxu0 0
      %561 = vmatprep.subr.bf16.mxu0 0
      %562 = vmatpush2.bf16.msra.mxu0 0
      %563 = vmatprep.subr.bf16.mxu0 0
      %564 = vmatpush2.bf16.msra.mxu0 0
      %565 = vmatprep.subr.bf16.mxu0 0
      %566 = vmatpush2.bf16.msra.mxu0 0
      %567 = vmatprep.subr.bf16.mxu0 0
      %568 = vmatpush2.bf16.msra.mxu0 0
      %569 = vmatprep.subr.bf16.mxu0 0
      %570 = vmatpush2.bf16.msra.mxu0 0
      %571 = vmatprep.subr.bf16.mxu0 0
      %572 = vmatpush2.bf16.msra.mxu0 0
      %573 = vmatprep.mubr.bf16.mxu0 0
      %574 = vmatmul.mubr.bf16.gmra.mxu0 %v533
      %v575 = vpop.f32.mrf.mxu0
      %v576 = vadd.f32 0.0, %v575
      %v577 = vpop.f32.mrf.mxu0
      %v578 = vpop.f32.mrf.mxu0
      %v579 = vadd.f32 0.0, %v578
      %v580 = vpop.f32.mrf.mxu0
      %581 = vmatprep.mubr.bf16.mxu0 0
      %582 = vmatmul.mubr.bf16.gmra.mxu0 %v535
      %v583 = vpop.f32.mrf.mxu0
      %v584 = vadd.f32 0.0, %v583
      %v585 = vpop.f32.mrf.mxu0
      %v586 = vpop.f32.mrf.mxu0
      %v587 = vadd.f32 0.0, %v586
      %v588 = vpop.f32.mrf.mxu0
      %589 = vmatprep.mubr.bf16.mxu0 0
      %590 = vmatmul.mubr.bf16.gmra.mxu0 %v537
      %v591 = vpop.f32.mrf.mxu0
      %v592 = vadd.f32 0.0, %v591
      %v593 = vpop.f32.mrf.mxu0
      %v594 = vpop.f32.mrf.mxu0
      %v595 = vadd.f32 0.0, %v594
      %v596 = vpop.f32.mrf.mxu0
      %597 = vmatprep.mubr.bf16.mxu0 0
      %598 = vmatmul.mubr.bf16.gmra.mxu0 %v539
      %v599 = vpop.f32.mrf.mxu0
      %v600 = vadd.f32 0.0, %v599
      %v601 = vpop.f32.mrf.mxu0
      %v602 = vpop.f32.mrf.mxu0
      %v603 = vadd.f32 0.0, %v602
      %v604 = vpop.f32.mrf.mxu0
      %605 = vdwg.mxu0
      %v606 = vsel %vm506, %v576, 0.0
      %v607 = vsel %vm506, %v579, 0.0
      %v608 = vadd.f32 %v606, %v607
      %v609 = vsel %vm506, %v584, 0.0
      %v610 = vadd.f32 %v608, %v609
      %v611 = vsel %vm506, %v587, 0.0
      %v612 = vadd.f32 %v610, %v611
      %v613 = vsel %vm506, %v592, 0.0
      %v614 = vadd.f32 %v612, %v613
      %v615 = vsel %vm506, %v595, 0.0
      %v616 = vadd.f32 %v614, %v615
      %v617 = vsel %vm506, %v600, 0.0
      %v618 = vadd.f32 %v616, %v617
      %v619 = vsel %vm506, %v603, 0.0
      %v620 = vadd.f32 %v618, %v619
      %v621 = vrot.slane %v620, 4
      %v622 = vadd.f32 %v620, %v621
      %v623 = vrot.slane %v622, 2
      %v624 = vadd.f32 %v622, %v623
      %v625 = vrot.slane %v624, 1
      %v626 = vadd.f32 %v624, %v625
      %v627 = vadd.f32 %v626, 0.0
      %v628 = vmul.f32 %v576, %v576
      %v629 = vmul.f32 %v579, %v579
      %v630 = vmul.f32 %v584, %v584
      %v631 = vmul.f32 %v587, %v587
      %v632 = vmul.f32 %v592, %v592
      %v633 = vmul.f32 %v595, %v595
      %v634 = vmul.f32 %v600, %v600
      %v635 = vmul.f32 %v603, %v603
      %v636 = vsel %vm506, %v628, 0.0
      %v637 = vsel %vm506, %v629, 0.0
      %v638 = vadd.f32 %v636, %v637
      %v639 = vsel %vm506, %v630, 0.0
      %v640 = vadd.f32 %v638, %v639
      %v641 = vsel %vm506, %v631, 0.0
      %v642 = vadd.f32 %v640, %v641
      %v643 = vsel %vm506, %v632, 0.0
      %v644 = vadd.f32 %v642, %v643
      %v645 = vsel %vm506, %v633, 0.0
      %v646 = vadd.f32 %v644, %v645
      %v647 = vsel %vm506, %v634, 0.0
      %v648 = vadd.f32 %v646, %v647
      %v649 = vsel %vm506, %v635, 0.0
      %v650 = vadd.f32 %v648, %v649
      %v651 = vrot.slane %v650, 4
      %v652 = vadd.f32 %v650, %v651
      %v653 = vrot.slane %v652, 2
      %v654 = vadd.f32 %v652, %v653
      %v655 = vrot.slane %v654, 1
      %v656 = vadd.f32 %v654, %v655
      %v657 = vadd.f32 %v656, 0.0
      %658 = vst.msk [vmem:[#allocation2] sm:$0xff] %vm506, %v576
      %659 = vst.msk [vmem:[#allocation2 + $0x8] sm:$0xff] %vm506, %v579
      %660 = vst.msk [vmem:[#allocation2 + $0x10] sm:$0xff] %vm506, %v584
      %661 = vst.msk [vmem:[#allocation2 + $0x18] sm:$0xff] %vm506, %v587
      %662 = vst.msk [vmem:[#allocation2 + $0x20] sm:$0xff] %vm506, %v592
      %663 = vst.msk [vmem:[#allocation2 + $0x28] sm:$0xff] %vm506, %v595
      %664 = vst.msk [vmem:[#allocation2 + $0x30] sm:$0xff] %vm506, %v600
      %665 = vst.msk [vmem:[#allocation2 + $0x38] sm:$0xff] %vm506, %v603
      %v666 = vld [vmem:[%s145] sm:$0xe]
      %v667 = vld [vmem:[%s145 + $0x4] sm:$0x1]
      %v668 = vld [vmem:[%s145 + $0x8] sm:$0xe]
      %v669 = vld [vmem:[%s145 + $0xc] sm:$0x1]
      %v670 = vld [vmem:[%s145 + $0x10] sm:$0xe]
      %v671 = vld [vmem:[%s145 + $0x14] sm:$0x1]
      %v672 = vld [vmem:[%s145 + $0x18] sm:$0xe]
      %v673 = vld [vmem:[%s145 + $0x1c] sm:$0x1]
      %v674 = vld [vmem:[%s145 + $0x20] sm:$0xe]
      %v675 = vld [vmem:[%s145 + $0x24] sm:$0x1]
      %v676 = vld [vmem:[%s145 + $0x28] sm:$0xe]
      %v677 = vld [vmem:[%s145 + $0x2c] sm:$0x1]
      %v678 = vld [vmem:[%s145 + $0x30] sm:$0xe]
      %v679 = vld [vmem:[%s145 + $0x34] sm:$0x1]
      %v680 = vld [vmem:[%s145 + $0x38] sm:$0xe]
      %v681 = vld [vmem:[%s145 + $0x3c] sm:$0x1]
      %vm698 = vcmask 1042432
      %vm699 = vcmask 1046532
      %vm700 = vmor %vm698, %vm699
      %v701 = vrot.slane %v666, 5
      %v702 = vrot.slane %v701, 4
      %v703 = vrot.slane %v667, 5
      %v704 = vsel %vm700, %v702, %v703
      %v705 = vrot.slane %v668, 5
      %v706 = vrot.slane %v705, 4
      %v707 = vrot.slane %v669, 5
      %v708 = vsel %vm700, %v706, %v707
      %v709 = vrot.slane %v670, 5
      %v710 = vrot.slane %v709, 4
      %v711 = vrot.slane %v671, 5
      %v712 = vsel %vm700, %v710, %v711
      %v713 = vrot.slane %v672, 5
      %v714 = vrot.slane %v713, 4
      %v715 = vrot.slane %v673, 5
      %v716 = vsel %vm700, %v714, %v715
      %v717 = vrot.slane %v674, 5
      %v718 = vrot.slane %v717, 4
      %v719 = vrot.slane %v675, 5
      %v720 = vsel %vm700, %v718, %v719
      %v721 = vrot.slane %v676, 5
      %v722 = vrot.slane %v721, 4
      %v723 = vrot.slane %v677, 5
      %v724 = vsel %vm700, %v722, %v723
      %v725 = vrot.slane %v678, 5
      %v726 = vrot.slane %v725, 4
      %v727 = vrot.slane %v679, 5
      %v728 = vsel %vm700, %v726, %v727
      %v729 = vrot.slane %v680, 5
      %v730 = vrot.slane %v729, 4
      %v731 = vrot.slane %v681, 5
      %v732 = vsel %vm700, %v730, %v731
      %v733 = vld [vmem:[%s138] sm:$0xe]
      %v734 = vld [vmem:[%s138 + $0x4] sm:$0x1]
      %v735 = vld [vmem:[%s138 + $0x8] sm:$0xe]
      %v736 = vld [vmem:[%s138 + $0xc] sm:$0x1]
      %v737 = vld [vmem:[%s138 + $0x10] sm:$0xe]
      %v738 = vld [vmem:[%s138 + $0x14] sm:$0x1]
      %v739 = vld [vmem:[%s138 + $0x18] sm:$0xe]
      %v740 = vld [vmem:[%s138 + $0x1c] sm:$0x1]
      %v741 = vld [vmem:[%s138 + $0x20] sm:$0xe]
      %v742 = vld [vmem:[%s138 + $0x24] sm:$0x1]
      %v743 = vld [vmem:[%s138 + $0x28] sm:$0xe]
      %v744 = vld [vmem:[%s138 + $0x2c] sm:$0x1]
      %v745 = vld [vmem:[%s138 + $0x30] sm:$0xe]
      %v746 = vld [vmem:[%s138 + $0x34] sm:$0x1]
      %v747 = vld [vmem:[%s138 + $0x38] sm:$0xe]
      %v748 = vld [vmem:[%s138 + $0x3c] sm:$0x1]
      %v765 = vrot.slane %v733, 5
      %v766 = vrot.slane %v765, 4
      %v767 = vrot.slane %v734, 5
      %v768 = vsel %vm700, %v766, %v767
      %v769 = vrot.slane %v735, 5
      %v770 = vrot.slane %v769, 4
      %v771 = vrot.slane %v736, 5
      %v772 = vsel %vm700, %v770, %v771
      %v773 = vrot.slane %v737, 5
      %v774 = vrot.slane %v773, 4
      %v775 = vrot.slane %v738, 5
      %v776 = vsel %vm700, %v774, %v775
      %v777 = vrot.slane %v739, 5
      %v778 = vrot.slane %v777, 4
      %v779 = vrot.slane %v740, 5
      %v780 = vsel %vm700, %v778, %v779
      %v781 = vrot.slane %v741, 5
      %v782 = vrot.slane %v781, 4
      %v783 = vrot.slane %v742, 5
      %v784 = vsel %vm700, %v782, %v783
      %v785 = vrot.slane %v743, 5
      %v786 = vrot.slane %v785, 4
      %v787 = vrot.slane %v744, 5
      %v788 = vsel %vm700, %v786, %v787
      %v789 = vrot.slane %v745, 5
      %v790 = vrot.slane %v789, 4
      %v791 = vrot.slane %v746, 5
      %v792 = vsel %vm700, %v790, %v791
      %v793 = vrot.slane %v747, 5
      %v794 = vrot.slane %v793, 4
      %v795 = vrot.slane %v748, 5
      %v796 = vsel %vm700, %v794, %v795
      %v797 = vunpack.c.l.b16 %v704
      %v798 = vunpack.c.l.b16 %v708
      %v799 = vunpack.c.l.b16 %v712
      %v800 = vunpack.c.l.b16 %v716
      %v801 = vunpack.c.l.b16 %v720
      %v802 = vunpack.c.l.b16 %v724
      %v803 = vunpack.c.l.b16 %v728
      %v804 = vunpack.c.l.b16 %v732
      %v805 = vpack.c.b16 %v798, %v797
      %v806 = vpack.c.b16 %v800, %v799
      %v807 = vpack.c.b16 %v802, %v801
      %v808 = vpack.c.b16 %v804, %v803
      %809 = vrot.lane.b32.xlu0 %v805, 4
      %v810 = vpop.permute.xlu0 %809
      %811 = vrot.lane.b32.xlu0 %v806, 4
      %v812 = vpop.permute.xlu0 %811
      %813 = vrot.lane.b32.xlu0 %v807, 4
      %v814 = vpop.permute.xlu0 %813
      %815 = vrot.lane.b32.xlu0 %v808, 4
      %v816 = vpop.permute.xlu0 %815
      %v817 = vunpack.c.l.b16 %v768
      %v818 = vunpack.c.l.b16 %v772
      %v819 = vunpack.c.l.b16 %v776
      %v820 = vunpack.c.l.b16 %v780
      %v821 = vunpack.c.l.b16 %v784
      %v822 = vunpack.c.l.b16 %v788
      %v823 = vunpack.c.l.b16 %v792
      %v824 = vunpack.c.l.b16 %v796
      %v825 = vpack.c.b16 %v818, %v817
      %v826 = vpack.c.b16 %v820, %v819
      %v827 = vpack.c.b16 %v822, %v821
      %v828 = vpack.c.b16 %v824, %v823
      %829 = vrot.lane.b32.xlu0 %v825, 12
      %v830 = vpop.permute.xlu0 %829
      %831 = vrot.lane.b32.xlu0 %v826, 12
      %v832 = vpop.permute.xlu0 %831
      %833 = vrot.lane.b32.xlu0 %v827, 12
      %v834 = vpop.permute.xlu0 %833
      %835 = vrot.lane.b32.xlu0 %v828, 12
      %v836 = vpop.permute.xlu0 %835
      %v838 = vsel %vm493, %v413, %v810
      %v840 = vsel %vm493, %v414, %v812
      %v842 = vsel %vm493, %v415, %v814
      %v844 = vsel %vm493, %v416, %v816
      %v845 = vsel %vm506, %v838, %v458
      %v846 = vsel %vm506, %v840, %v460
      %v847 = vsel %vm506, %v842, %v462
      %v848 = vsel %vm506, %v844, %v464
      %v850 = vsel %vm515, %v845, %v830
      %v852 = vsel %vm515, %v846, %v832
      %v854 = vsel %vm515, %v847, %v834
      %v856 = vsel %vm515, %v848, %v836
      %s857 = scalar_lea.vmem %s1, 8
      %v858 = vld [vmem:[%s857] sm:$0xf]
      %v859 = vld [vmem:[%s857 + $0x4] sm:$0xf]
      %v862 = vunpack.c.l.b16 %v858
      %v863 = vunpack.c.l.b16 %v859
      %v864 = vpack.c.b16 %v863, %v862
      %v866 = vsel %vm532, %v850, 0
      %v868 = vsel %vm532, %v852, 0
      %v870 = vsel %vm532, %v854, 0
      %v872 = vsel %vm532, %v856, 0
      %874 = vmatprep.subr.bf16.mxu0 0
      %875 = vmatpush1.bf16.msra.mxu0 0
      %876 = vmatprep.subr.bf16.mxu0 0
      %877 = vmatpush1.bf16.msra.mxu0 0
      %878 = vmatprep.subr.bf16.mxu0 0
      %879 = vmatpush1.bf16.msra.mxu0 0
      %880 = vmatprep.subr.bf16.mxu0 0
      %881 = vmatpush1.bf16.msra.mxu0 0
      %882 = vmatprep.subr.bf16.mxu0 0
      %883 = vmatpush1.bf16.msra.mxu0 0
      %884 = vmatprep.subr.bf16.mxu0 0
      %885 = vmatpush1.bf16.msra.mxu0 0
      %886 = vmatprep.subr.bf16.mxu0 0
      %887 = vmatpush1.bf16.msra.mxu0 0
      %888 = vmatprep.subr.bf16.mxu0 0
      %889 = vmatpush1.bf16.msra.mxu0 %v864
      %890 = vmatprep.subr.bf16.mxu0 0
      %891 = vmatpush2.bf16.msra.mxu0 0
      %892 = vmatprep.subr.bf16.mxu0 0
      %893 = vmatpush2.bf16.msra.mxu0 0
      %894 = vmatprep.subr.bf16.mxu0 0
      %895 = vmatpush2.bf16.msra.mxu0 0
      %896 = vmatprep.subr.bf16.mxu0 0
      %897 = vmatpush2.bf16.msra.mxu0 0
      %898 = vmatprep.subr.bf16.mxu0 0
      %899 = vmatpush2.bf16.msra.mxu0 0
      %900 = vmatprep.subr.bf16.mxu0 0
      %901 = vmatpush2.bf16.msra.mxu0 0
      %902 = vmatprep.subr.bf16.mxu0 0
      %903 = vmatpush2.bf16.msra.mxu0 0
      %904 = vmatprep.subr.bf16.mxu0 0
      %905 = vmatpush2.bf16.msra.mxu0 0
      %906 = vmatprep.mubr.bf16.mxu0 0
      %907 = vmatmul.mubr.bf16.gmra.mxu0 %v866
      %v908 = vpop.f32.mrf.mxu0
      %v909 = vadd.f32 0.0, %v908
      %v910 = vpop.f32.mrf.mxu0
      %v911 = vpop.f32.mrf.mxu0
      %v912 = vadd.f32 0.0, %v911
      %v913 = vpop.f32.mrf.mxu0
      %914 = vmatprep.mubr.bf16.mxu0 0
      %915 = vmatmul.mubr.bf16.gmra.mxu0 %v868
      %v916 = vpop.f32.mrf.mxu0
      %v917 = vadd.f32 0.0, %v916
      %v918 = vpop.f32.mrf.mxu0
      %v919 = vpop.f32.mrf.mxu0
      %v920 = vadd.f32 0.0, %v919
      %v921 = vpop.f32.mrf.mxu0
      %922 = vmatprep.mubr.bf16.mxu0 0
      %923 = vmatmul.mubr.bf16.gmra.mxu0 %v870
      %v924 = vpop.f32.mrf.mxu0
      %v925 = vadd.f32 0.0, %v924
      %v926 = vpop.f32.mrf.mxu0
      %v927 = vpop.f32.mrf.mxu0
      %v928 = vadd.f32 0.0, %v927
      %v929 = vpop.f32.mrf.mxu0
      %930 = vmatprep.mubr.bf16.mxu0 0
      %931 = vmatmul.mubr.bf16.gmra.mxu0 %v872
      %v932 = vpop.f32.mrf.mxu0
      %v933 = vadd.f32 0.0, %v932
      %v934 = vpop.f32.mrf.mxu0
      %v935 = vpop.f32.mrf.mxu0
      %v936 = vadd.f32 0.0, %v935
      %v937 = vpop.f32.mrf.mxu0
      %938 = vdwg.mxu0
      %v939 = vsel %vm506, %v909, 0.0
      %v940 = vsel %vm506, %v912, 0.0
      %v941 = vadd.f32 %v939, %v940
      %v942 = vsel %vm506, %v917, 0.0
      %v943 = vadd.f32 %v941, %v942
      %v944 = vsel %vm506, %v920, 0.0
      %v945 = vadd.f32 %v943, %v944
      %v946 = vsel %vm506, %v925, 0.0
      %v947 = vadd.f32 %v945, %v946
      %v948 = vsel %vm506, %v928, 0.0
      %v949 = vadd.f32 %v947, %v948
      %v950 = vsel %vm506, %v933, 0.0
      %v951 = vadd.f32 %v949, %v950
      %v952 = vsel %vm506, %v936, 0.0
      %v953 = vadd.f32 %v951, %v952
      %v954 = vrot.slane %v953, 4
      %v955 = vadd.f32 %v953, %v954
      %v956 = vrot.slane %v955, 2
      %v957 = vadd.f32 %v955, %v956
      %v958 = vrot.slane %v957, 1
      %v959 = vadd.f32 %v957, %v958
      %v960 = vadd.f32 %v627, %v959
      %v961 = vmul.f32 %v909, %v909
      %v962 = vmul.f32 %v912, %v912
      %v963 = vmul.f32 %v917, %v917
      %v964 = vmul.f32 %v920, %v920
      %v965 = vmul.f32 %v925, %v925
      %v966 = vmul.f32 %v928, %v928
      %v967 = vmul.f32 %v933, %v933
      %v968 = vmul.f32 %v936, %v936
      %v969 = vsel %vm506, %v961, 0.0
      %v970 = vsel %vm506, %v962, 0.0
      %v971 = vadd.f32 %v969, %v970
      %v972 = vsel %vm506, %v963, 0.0
      %v973 = vadd.f32 %v971, %v972
      %v974 = vsel %vm506, %v964, 0.0
      %v975 = vadd.f32 %v973, %v974
      %v976 = vsel %vm506, %v965, 0.0
      %v977 = vadd.f32 %v975, %v976
      %v978 = vsel %vm506, %v966, 0.0
      %v979 = vadd.f32 %v977, %v978
      %v980 = vsel %vm506, %v967, 0.0
      %v981 = vadd.f32 %v979, %v980
      %v982 = vsel %vm506, %v968, 0.0
      %v983 = vadd.f32 %v981, %v982
      %v984 = vrot.slane %v983, 4
      %v985 = vadd.f32 %v983, %v984
      %v986 = vrot.slane %v985, 2
      %v987 = vadd.f32 %v985, %v986
      %v988 = vrot.slane %v987, 1
      %v989 = vadd.f32 %v987, %v988
      %v990 = vadd.f32 %v657, %v989
      %999 = vrot.lane.b32.xlu0 %v909, 8
      %v1000 = vpop.permute.xlu0 %999
      %1001 = vrot.lane.b32.xlu0 %v912, 8
      %v1002 = vpop.permute.xlu0 %1001
      %1003 = vrot.lane.b32.xlu0 %v917, 8
      %v1004 = vpop.permute.xlu0 %1003
      %1005 = vrot.lane.b32.xlu0 %v920, 8
      %v1006 = vpop.permute.xlu0 %1005
      %1007 = vrot.lane.b32.xlu0 %v925, 8
      %v1008 = vpop.permute.xlu0 %1007
      %1009 = vrot.lane.b32.xlu0 %v928, 8
      %v1010 = vpop.permute.xlu0 %1009
      %1011 = vrot.lane.b32.xlu0 %v933, 8
      %v1012 = vpop.permute.xlu0 %1011
      %1013 = vrot.lane.b32.xlu0 %v936, 8
      %v1014 = vpop.permute.xlu0 %1013
      %vm1023 = vcmask 130112
      %1024 = vst.msk [vmem:[#allocation2] sm:$0xff] %vm1023, %v1000
      %1025 = vst.msk [vmem:[#allocation2 + $0x8] sm:$0xff] %vm1023, %v1002
      %1026 = vst.msk [vmem:[#allocation2 + $0x10] sm:$0xff] %vm1023, %v1004
      %1027 = vst.msk [vmem:[#allocation2 + $0x18] sm:$0xff] %vm1023, %v1006
      %1028 = vst.msk [vmem:[#allocation2 + $0x20] sm:$0xff] %vm1023, %v1008
      %1029 = vst.msk [vmem:[#allocation2 + $0x28] sm:$0xff] %vm1023, %v1010
      %1030 = vst.msk [vmem:[#allocation2 + $0x30] sm:$0xff] %vm1023, %v1012
      %1031 = vst.msk [vmem:[#allocation2 + $0x38] sm:$0xff] %vm1023, %v1014
      %s1032 = scalar_lea.vmem %s138, 16
      %v1033 = vld [vmem:[%s1032] sm:$0xf]
      %v1034 = vld [vmem:[%s1032 + $0x4] sm:$0x1]
      %v1035 = vld [vmem:[%s1032 + $0x8] sm:$0xf]
      %v1036 = vld [vmem:[%s1032 + $0xc] sm:$0x1]
      %v1037 = vld [vmem:[%s1032 + $0x10] sm:$0xf]
      %v1038 = vld [vmem:[%s1032 + $0x14] sm:$0x1]
      %v1039 = vld [vmem:[%s1032 + $0x18] sm:$0xf]
      %v1040 = vld [vmem:[%s1032 + $0x1c] sm:$0x1]
      %v1041 = vld [vmem:[%s1032 + $0x20] sm:$0xf]
      %v1042 = vld [vmem:[%s1032 + $0x24] sm:$0x1]
      %v1043 = vld [vmem:[%s1032 + $0x28] sm:$0xf]
      %v1044 = vld [vmem:[%s1032 + $0x2c] sm:$0x1]
      %v1045 = vld [vmem:[%s1032 + $0x30] sm:$0xf]
      %v1046 = vld [vmem:[%s1032 + $0x34] sm:$0x1]
      %v1047 = vld [vmem:[%s1032 + $0x38] sm:$0xf]
      %v1048 = vld [vmem:[%s1032 + $0x3c] sm:$0x1]
      %v1050 = vshrl.u32 %v1033, 16
      %v1052 = vrot.slane %v1050, 4
      %v1053 = vshll.u32 %v1033, 16
      %v1055 = vrot.slane %v1053, 5
      %v1056 = vor.u32 %v1052, %v1055
      %v1057 = vrot.slane %v1056, 4
      %v1059 = vshll.u32 %v1034, 16
      %v1061 = vrot.slane %v1059, 5
      %v1062 = vsel %vm164, %v1057, %v1061
      %v1064 = vshrl.u32 %v1035, 16
      %v1066 = vrot.slane %v1064, 4
      %v1067 = vshll.u32 %v1035, 16
      %v1069 = vrot.slane %v1067, 5
      %v1070 = vor.u32 %v1066, %v1069
      %v1071 = vrot.slane %v1070, 4
      %v1073 = vshll.u32 %v1036, 16
      %v1075 = vrot.slane %v1073, 5
      %v1076 = vsel %vm164, %v1071, %v1075
      %v1078 = vshrl.u32 %v1037, 16
      %v1080 = vrot.slane %v1078, 4
      %v1081 = vshll.u32 %v1037, 16
      %v1083 = vrot.slane %v1081, 5
      %v1084 = vor.u32 %v1080, %v1083
      %v1085 = vrot.slane %v1084, 4
      %v1087 = vshll.u32 %v1038, 16
      %v1089 = vrot.slane %v1087, 5
      %v1090 = vsel %vm164, %v1085, %v1089
      %v1092 = vshrl.u32 %v1039, 16
      %v1094 = vrot.slane %v1092, 4
      %v1095 = vshll.u32 %v1039, 16
      %v1097 = vrot.slane %v1095, 5
      %v1098 = vor.u32 %v1094, %v1097
      %v1099 = vrot.slane %v1098, 4
      %v1101 = vshll.u32 %v1040, 16
      %v1103 = vrot.slane %v1101, 5
      %v1104 = vsel %vm164, %v1099, %v1103
      %v1106 = vshrl.u32 %v1041, 16
      %v1108 = vrot.slane %v1106, 4
      %v1109 = vshll.u32 %v1041, 16
      %v1111 = vrot.slane %v1109, 5
      %v1112 = vor.u32 %v1108, %v1111
      %v1113 = vrot.slane %v1112, 4
      %v1115 = vshll.u32 %v1042, 16
      %v1117 = vrot.slane %v1115, 5
      %v1118 = vsel %vm164, %v1113, %v1117
      %v1120 = vshrl.u32 %v1043, 16
      %v1122 = vrot.slane %v1120, 4
      %v1123 = vshll.u32 %v1043, 16
      %v1125 = vrot.slane %v1123, 5
      %v1126 = vor.u32 %v1122, %v1125
      %v1127 = vrot.slane %v1126, 4
      %v1129 = vshll.u32 %v1044, 16
      %v1131 = vrot.slane %v1129, 5
      %v1132 = vsel %vm164, %v1127, %v1131
      %v1134 = vshrl.u32 %v1045, 16
      %v1136 = vrot.slane %v1134, 4
      %v1137 = vshll.u32 %v1045, 16
      %v1139 = vrot.slane %v1137, 5
      %v1140 = vor.u32 %v1136, %v1139
      %v1141 = vrot.slane %v1140, 4
      %v1143 = vshll.u32 %v1046, 16
      %v1145 = vrot.slane %v1143, 5
      %v1146 = vsel %vm164, %v1141, %v1145
      %v1148 = vshrl.u32 %v1047, 16
      %v1150 = vrot.slane %v1148, 4
      %v1151 = vshll.u32 %v1047, 16
      %v1153 = vrot.slane %v1151, 5
      %v1154 = vor.u32 %v1150, %v1153
      %v1155 = vrot.slane %v1154, 4
      %v1157 = vshll.u32 %v1048, 16
      %v1159 = vrot.slane %v1157, 5
      %v1160 = vsel %vm164, %v1155, %v1159
      %v1161 = vunpack.c.l.b16 %v1062
      %v1162 = vunpack.c.l.b16 %v1076
      %v1163 = vunpack.c.l.b16 %v1090
      %v1164 = vunpack.c.l.b16 %v1104
      %v1165 = vunpack.c.l.b16 %v1118
      %v1166 = vunpack.c.l.b16 %v1132
      %v1167 = vunpack.c.l.b16 %v1146
      %v1168 = vunpack.c.l.b16 %v1160
      %v1169 = vpack.c.b16 %v1162, %v1161
      %v1170 = vpack.c.b16 %v1164, %v1163
      %v1171 = vpack.c.b16 %v1166, %v1165
      %v1172 = vpack.c.b16 %v1168, %v1167
      %1173 = vrot.lane.b32.xlu0 %v1169, 8
      %v1174 = vpop.permute.xlu0 %1173
      %1175 = vrot.lane.b32.xlu0 %v1170, 8
      %v1176 = vpop.permute.xlu0 %1175
      %1177 = vrot.lane.b32.xlu0 %v1171, 8
      %v1178 = vpop.permute.xlu0 %1177
      %1179 = vrot.lane.b32.xlu0 %v1172, 8
      %v1180 = vpop.permute.xlu0 %1179
      %v1189 = vunpack.c.l.b16 %v1033
      %v1190 = vunpack.c.l.b16 %v1035
      %v1191 = vunpack.c.l.b16 %v1037
      %v1192 = vunpack.c.l.b16 %v1039
      %v1193 = vunpack.c.l.b16 %v1041
      %v1194 = vunpack.c.l.b16 %v1043
      %v1195 = vunpack.c.l.b16 %v1045
      %v1196 = vunpack.c.l.b16 %v1047
      %v1197 = vpack.c.b16 %v1190, %v1189
      %v1198 = vpack.c.b16 %v1192, %v1191
      %v1199 = vpack.c.b16 %v1194, %v1193
      %v1200 = vpack.c.b16 %v1196, %v1195
      %1201 = vrot.lane.b32.xlu0 %v1197, 12
      %v1202 = vpop.permute.xlu0 %1201
      %1203 = vrot.lane.b32.xlu0 %v1198, 12
      %v1204 = vpop.permute.xlu0 %1203
      %1205 = vrot.lane.b32.xlu0 %v1199, 12
      %v1206 = vpop.permute.xlu0 %1205
      %1207 = vrot.lane.b32.xlu0 %v1200, 12
      %v1208 = vpop.permute.xlu0 %1207
      %v1210 = vsel %vm506, %v496, %v1174
      %v1212 = vsel %vm506, %v499, %v1176
      %v1214 = vsel %vm506, %v502, %v1178
      %v1216 = vsel %vm506, %v505, %v1180
      %v1218 = vsel %vm515, %v1210, %v1202
      %v1220 = vsel %vm515, %v1212, %v1204
      %v1222 = vsel %vm515, %v1214, %v1206
      %v1224 = vsel %vm515, %v1216, %v1208
      %s1225 = scalar_lea.vmem %s1, 16
      %v1226 = vld [vmem:[%s1225] sm:$0xf]
      %v1227 = vld [vmem:[%s1225 + $0x4] sm:$0xf]
      %v1230 = vunpack.c.l.b16 %v1226
      %v1231 = vunpack.c.l.b16 %v1227
      %v1232 = vpack.c.b16 %v1231, %v1230
      %v1234 = vsel %vm532, %v1218, 0
      %v1236 = vsel %vm532, %v1220, 0
      %v1238 = vsel %vm532, %v1222, 0
      %v1240 = vsel %vm532, %v1224, 0
      %1242 = vmatprep.subr.bf16.mxu0 0
      %1243 = vmatpush1.bf16.msra.mxu0 0
      %1244 = vmatprep.subr.bf16.mxu0 0
      %1245 = vmatpush1.bf16.msra.mxu0 0
      %1246 = vmatprep.subr.bf16.mxu0 0
      %1247 = vmatpush1.bf16.msra.mxu0 0
      %1248 = vmatprep.subr.bf16.mxu0 0
      %1249 = vmatpush1.bf16.msra.mxu0 0
      %1250 = vmatprep.subr.bf16.mxu0 0
      %1251 = vmatpush1.bf16.msra.mxu0 0
      %1252 = vmatprep.subr.bf16.mxu0 0
      %1253 = vmatpush1.bf16.msra.mxu0 0
      %1254 = vmatprep.subr.bf16.mxu0 0
      %1255 = vmatpush1.bf16.msra.mxu0 0
      %1256 = vmatprep.subr.bf16.mxu0 0
      %1257 = vmatpush1.bf16.msra.mxu0 %v1232
      %1258 = vmatprep.subr.bf16.mxu0 0
      %1259 = vmatpush2.bf16.msra.mxu0 0
      %1260 = vmatprep.subr.bf16.mxu0 0
      %1261 = vmatpush2.bf16.msra.mxu0 0
      %1262 = vmatprep.subr.bf16.mxu0 0
      %1263 = vmatpush2.bf16.msra.mxu0 0
      %1264 = vmatprep.subr.bf16.mxu0 0
      %1265 = vmatpush2.bf16.msra.mxu0 0
      %1266 = vmatprep.subr.bf16.mxu0 0
      %1267 = vmatpush2.bf16.msra.mxu0 0
      %1268 = vmatprep.subr.bf16.mxu0 0
      %1269 = vmatpush2.bf16.msra.mxu0 0
      %1270 = vmatprep.subr.bf16.mxu0 0
      %1271 = vmatpush2.bf16.msra.mxu0 0
      %1272 = vmatprep.subr.bf16.mxu0 0
      %1273 = vmatpush2.bf16.msra.mxu0 0
      %1274 = vmatprep.mubr.bf16.mxu0 0
      %1275 = vmatmul.mubr.bf16.gmra.mxu0 %v1234
      %v1276 = vpop.f32.mrf.mxu0
      %v1277 = vadd.f32 0.0, %v1276
      %v1278 = vpop.f32.mrf.mxu0
      %v1279 = vpop.f32.mrf.mxu0
      %v1280 = vadd.f32 0.0, %v1279
      %v1281 = vpop.f32.mrf.mxu0
      %1282 = vmatprep.mubr.bf16.mxu0 0
      %1283 = vmatmul.mubr.bf16.gmra.mxu0 %v1236
      %v1284 = vpop.f32.mrf.mxu0
      %v1285 = vadd.f32 0.0, %v1284
      %v1286 = vpop.f32.mrf.mxu0
      %v1287 = vpop.f32.mrf.mxu0
      %v1288 = vadd.f32 0.0, %v1287
      %v1289 = vpop.f32.mrf.mxu0
      %1290 = vmatprep.mubr.bf16.mxu0 0
      %1291 = vmatmul.mubr.bf16.gmra.mxu0 %v1238
      %v1292 = vpop.f32.mrf.mxu0
      %v1293 = vadd.f32 0.0, %v1292
      %v1294 = vpop.f32.mrf.mxu0
      %v1295 = vpop.f32.mrf.mxu0
      %v1296 = vadd.f32 0.0, %v1295
      %v1297 = vpop.f32.mrf.mxu0
      %1298 = vmatprep.mubr.bf16.mxu0 0
      %1299 = vmatmul.mubr.bf16.gmra.mxu0 %v1240
      %v1300 = vpop.f32.mrf.mxu0
      %v1301 = vadd.f32 0.0, %v1300
      %v1302 = vpop.f32.mrf.mxu0
      %v1303 = vpop.f32.mrf.mxu0
      %v1304 = vadd.f32 0.0, %v1303
      %v1305 = vpop.f32.mrf.mxu0
      %1306 = vdwg.mxu0
      %v1307 = vsel %vm506, %v1277, 0.0
      %v1308 = vsel %vm506, %v1280, 0.0
      %v1309 = vadd.f32 %v1307, %v1308
      %v1310 = vsel %vm506, %v1285, 0.0
      %v1311 = vadd.f32 %v1309, %v1310
      %v1312 = vsel %vm506, %v1288, 0.0
      %v1313 = vadd.f32 %v1311, %v1312
      %v1314 = vsel %vm506, %v1293, 0.0
      %v1315 = vadd.f32 %v1313, %v1314
      %v1316 = vsel %vm506, %v1296, 0.0
      %v1317 = vadd.f32 %v1315, %v1316
      %v1318 = vsel %vm506, %v1301, 0.0
      %v1319 = vadd.f32 %v1317, %v1318
      %v1320 = vsel %vm506, %v1304, 0.0
      %v1321 = vadd.f32 %v1319, %v1320
      %v1322 = vrot.slane %v1321, 4
      %v1323 = vadd.f32 %v1321, %v1322
      %v1324 = vrot.slane %v1323, 2
      %v1325 = vadd.f32 %v1323, %v1324
      %v1326 = vrot.slane %v1325, 1
      %v1327 = vadd.f32 %v1325, %v1326
      %v1328 = vadd.f32 %v960, %v1327
      %v1329 = vmul.f32 %v1277, %v1277
      %v1330 = vmul.f32 %v1280, %v1280
      %v1331 = vmul.f32 %v1285, %v1285
      %v1332 = vmul.f32 %v1288, %v1288
      %v1333 = vmul.f32 %v1293, %v1293
      %v1334 = vmul.f32 %v1296, %v1296
      %v1335 = vmul.f32 %v1301, %v1301
      %v1336 = vmul.f32 %v1304, %v1304
      %v1337 = vsel %vm506, %v1329, 0.0
      %v1338 = vsel %vm506, %v1330, 0.0
      %v1339 = vadd.f32 %v1337, %v1338
      %v1340 = vsel %vm506, %v1331, 0.0
      %v1341 = vadd.f32 %v1339, %v1340
      %v1342 = vsel %vm506, %v1332, 0.0
      %v1343 = vadd.f32 %v1341, %v1342
      %v1344 = vsel %vm506, %v1333, 0.0
      %v1345 = vadd.f32 %v1343, %v1344
      %v1346 = vsel %vm506, %v1334, 0.0
      %v1347 = vadd.f32 %v1345, %v1346
      %v1348 = vsel %vm506, %v1335, 0.0
      %v1349 = vadd.f32 %v1347, %v1348
      %v1350 = vsel %vm506, %v1336, 0.0
      %v1351 = vadd.f32 %v1349, %v1350
      %v1352 = vrot.slane %v1351, 4
      %v1353 = vadd.f32 %v1351, %v1352
      %v1354 = vrot.slane %v1353, 2
      %v1355 = vadd.f32 %v1353, %v1354
      %v1356 = vrot.slane %v1355, 1
      %v1357 = vadd.f32 %v1355, %v1356
      %v1358 = vadd.f32 %v990, %v1357
      %1367 = vrot.lane.b32.xlu0 %v1277, 16
      %v1368 = vpop.permute.xlu0 %1367
      %1369 = vrot.lane.b32.xlu0 %v1280, 16
      %v1370 = vpop.permute.xlu0 %1369
      %1371 = vrot.lane.b32.xlu0 %v1285, 16
      %v1372 = vpop.permute.xlu0 %1371
      %1373 = vrot.lane.b32.xlu0 %v1288, 16
      %v1374 = vpop.permute.xlu0 %1373
      %1375 = vrot.lane.b32.xlu0 %v1293, 16
      %v1376 = vpop.permute.xlu0 %1375
      %1377 = vrot.lane.b32.xlu0 %v1296, 16
      %v1378 = vpop.permute.xlu0 %1377
      %1379 = vrot.lane.b32.xlu0 %v1301, 16
      %v1380 = vpop.permute.xlu0 %1379
      %1381 = vrot.lane.b32.xlu0 %v1304, 16
      %v1382 = vpop.permute.xlu0 %1381
      %vm1391 = vcmask 195712
      %1392 = vst.msk [vmem:[#allocation2] sm:$0xff] %vm1391, %v1368
      %1393 = vst.msk [vmem:[#allocation2 + $0x8] sm:$0xff] %vm1391, %v1370
      %1394 = vst.msk [vmem:[#allocation2 + $0x10] sm:$0xff] %vm1391, %v1372
      %1395 = vst.msk [vmem:[#allocation2 + $0x18] sm:$0xff] %vm1391, %v1374
      %1396 = vst.msk [vmem:[#allocation2 + $0x20] sm:$0xff] %vm1391, %v1376
      %1397 = vst.msk [vmem:[#allocation2 + $0x28] sm:$0xff] %vm1391, %v1378
      %1398 = vst.msk [vmem:[#allocation2 + $0x30] sm:$0xff] %vm1391, %v1380
      %1399 = vst.msk [vmem:[#allocation2 + $0x38] sm:$0xff] %vm1391, %v1382
      %v1400 = vld [vmem:[%s1032] sm:$0xe]
      %v1401 = vld [vmem:[%s1032 + $0x4] sm:$0x1]
      %v1402 = vld [vmem:[%s1032 + $0x8] sm:$0xe]
      %v1403 = vld [vmem:[%s1032 + $0xc] sm:$0x1]
      %v1404 = vld [vmem:[%s1032 + $0x10] sm:$0xe]
      %v1405 = vld [vmem:[%s1032 + $0x14] sm:$0x1]
      %v1406 = vld [vmem:[%s1032 + $0x18] sm:$0xe]
      %v1407 = vld [vmem:[%s1032 + $0x1c] sm:$0x1]
      %v1408 = vld [vmem:[%s1032 + $0x20] sm:$0xe]
      %v1409 = vld [vmem:[%s1032 + $0x24] sm:$0x1]
      %v1410 = vld [vmem:[%s1032 + $0x28] sm:$0xe]
      %v1411 = vld [vmem:[%s1032 + $0x2c] sm:$0x1]
      %v1412 = vld [vmem:[%s1032 + $0x30] sm:$0xe]
      %v1413 = vld [vmem:[%s1032 + $0x34] sm:$0x1]
      %v1414 = vld [vmem:[%s1032 + $0x38] sm:$0xe]
      %v1415 = vld [vmem:[%s1032 + $0x3c] sm:$0x1]
      %v1432 = vrot.slane %v1400, 5
      %v1433 = vrot.slane %v1432, 4
      %v1434 = vrot.slane %v1401, 5
      %v1435 = vsel %vm700, %v1433, %v1434
      %v1436 = vrot.slane %v1402, 5
      %v1437 = vrot.slane %v1436, 4
      %v1438 = vrot.slane %v1403, 5
      %v1439 = vsel %vm700, %v1437, %v1438
      %v1440 = vrot.slane %v1404, 5
      %v1441 = vrot.slane %v1440, 4
      %v1442 = vrot.slane %v1405, 5
      %v1443 = vsel %vm700, %v1441, %v1442
      %v1444 = vrot.slane %v1406, 5
      %v1445 = vrot.slane %v1444, 4
      %v1446 = vrot.slane %v1407, 5
      %v1447 = vsel %vm700, %v1445, %v1446
      %v1448 = vrot.slane %v1408, 5
      %v1449 = vrot.slane %v1448, 4
      %v1450 = vrot.slane %v1409, 5
      %v1451 = vsel %vm700, %v1449, %v1450
      %v1452 = vrot.slane %v1410, 5
      %v1453 = vrot.slane %v1452, 4
      %v1454 = vrot.slane %v1411, 5
      %v1455 = vsel %vm700, %v1453, %v1454
      %v1456 = vrot.slane %v1412, 5
      %v1457 = vrot.slane %v1456, 4
      %v1458 = vrot.slane %v1413, 5
      %v1459 = vsel %vm700, %v1457, %v1458
      %v1460 = vrot.slane %v1414, 5
      %v1461 = vrot.slane %v1460, 4
      %v1462 = vrot.slane %v1415, 5
      %v1463 = vsel %vm700, %v1461, %v1462
      %v1464 = vunpack.c.l.b16 %v1435
      %v1465 = vunpack.c.l.b16 %v1439
      %v1466 = vunpack.c.l.b16 %v1443
      %v1467 = vunpack.c.l.b16 %v1447
      %v1468 = vunpack.c.l.b16 %v1451
      %v1469 = vunpack.c.l.b16 %v1455
      %v1470 = vunpack.c.l.b16 %v1459
      %v1471 = vunpack.c.l.b16 %v1463
      %v1472 = vpack.c.b16 %v1465, %v1464
      %v1473 = vpack.c.b16 %v1467, %v1466
      %v1474 = vpack.c.b16 %v1469, %v1468
      %v1475 = vpack.c.b16 %v1471, %v1470
      %1476 = vrot.lane.b32.xlu0 %v1472, 12
      %v1477 = vpop.permute.xlu0 %1476
      %1478 = vrot.lane.b32.xlu0 %v1473, 12
      %v1479 = vpop.permute.xlu0 %1478
      %1480 = vrot.lane.b32.xlu0 %v1474, 12
      %v1481 = vpop.permute.xlu0 %1480
      %1482 = vrot.lane.b32.xlu0 %v1475, 12
      %v1483 = vpop.permute.xlu0 %1482
      %v1484 = vsel %vm506, %v838, %v1174
      %v1485 = vsel %vm506, %v840, %v1176
      %v1486 = vsel %vm506, %v842, %v1178
      %v1487 = vsel %vm506, %v844, %v1180
      %v1489 = vsel %vm515, %v1484, %v1477
      %v1491 = vsel %vm515, %v1485, %v1479
      %v1493 = vsel %vm515, %v1486, %v1481
      %v1495 = vsel %vm515, %v1487, %v1483
      %s1496 = scalar_lea.vmem %s1, 24
      %v1497 = vld [vmem:[%s1496] sm:$0xf]
      %v1498 = vld [vmem:[%s1496 + $0x4] sm:$0xf]
      %v1501 = vunpack.c.l.b16 %v1497
      %v1502 = vunpack.c.l.b16 %v1498
      %v1503 = vpack.c.b16 %v1502, %v1501
      %v1505 = vsel %vm532, %v1489, 0
      %v1507 = vsel %vm532, %v1491, 0
      %v1509 = vsel %vm532, %v1493, 0
      %v1511 = vsel %vm532, %v1495, 0
      %1513 = vmatprep.subr.bf16.mxu0 0
      %1514 = vmatpush1.bf16.msra.mxu0 0
      %1515 = vmatprep.subr.bf16.mxu0 0
      %1516 = vmatpush1.bf16.msra.mxu0 0
      %1517 = vmatprep.subr.bf16.mxu0 0
      %1518 = vmatpush1.bf16.msra.mxu0 0
      %1519 = vmatprep.subr.bf16.mxu0 0
      %1520 = vmatpush1.bf16.msra.mxu0 0
      %1521 = vmatprep.subr.bf16.mxu0 0
      %1522 = vmatpush1.bf16.msra.mxu0 0
      %1523 = vmatprep.subr.bf16.mxu0 0
      %1524 = vmatpush1.bf16.msra.mxu0 0
      %1525 = vmatprep.subr.bf16.mxu0 0
      %1526 = vmatpush1.bf16.msra.mxu0 0
      %1527 = vmatprep.subr.bf16.mxu0 0
      %1528 = vmatpush1.bf16.msra.mxu0 %v1503
      %1529 = vmatprep.subr.bf16.mxu0 0
      %1530 = vmatpush2.bf16.msra.mxu0 0
      %1531 = vmatprep.subr.bf16.mxu0 0
      %1532 = vmatpush2.bf16.msra.mxu0 0
      %1533 = vmatprep.subr.bf16.mxu0 0
      %1534 = vmatpush2.bf16.msra.mxu0 0
      %1535 = vmatprep.subr.bf16.mxu0 0
      %1536 = vmatpush2.bf16.msra.mxu0 0
      %1537 = vmatprep.subr.bf16.mxu0 0
      %1538 = vmatpush2.bf16.msra.mxu0 0
      %1539 = vmatprep.subr.bf16.mxu0 0
      %1540 = vmatpush2.bf16.msra.mxu0 0
      %1541 = vmatprep.subr.bf16.mxu0 0
      %1542 = vmatpush2.bf16.msra.mxu0 0
      %1543 = vmatprep.subr.bf16.mxu0 0
      %1544 = vmatpush2.bf16.msra.mxu0 0
      %1545 = vmatprep.mubr.bf16.mxu0 0
      %1546 = vmatmul.mubr.bf16.gmra.mxu0 %v1505
      %v1547 = vpop.f32.mrf.mxu0
      %v1548 = vadd.f32 0.0, %v1547
      %v1549 = vpop.f32.mrf.mxu0
      %v1550 = vpop.f32.mrf.mxu0
      %v1551 = vadd.f32 0.0, %v1550
      %v1552 = vpop.f32.mrf.mxu0
      %1553 = vmatprep.mubr.bf16.mxu0 0
      %1554 = vmatmul.mubr.bf16.gmra.mxu0 %v1507
      %v1555 = vpop.f32.mrf.mxu0
      %v1556 = vadd.f32 0.0, %v1555
      %v1557 = vpop.f32.mrf.mxu0
      %v1558 = vpop.f32.mrf.mxu0
      %v1559 = vadd.f32 0.0, %v1558
      %v1560 = vpop.f32.mrf.mxu0
      %1561 = vmatprep.mubr.bf16.mxu0 0
      %1562 = vmatmul.mubr.bf16.gmra.mxu0 %v1509
      %v1563 = vpop.f32.mrf.mxu0
      %v1564 = vadd.f32 0.0, %v1563
      %v1565 = vpop.f32.mrf.mxu0
      %v1566 = vpop.f32.mrf.mxu0
      %v1567 = vadd.f32 0.0, %v1566
      %v1568 = vpop.f32.mrf.mxu0
      %1569 = vmatprep.mubr.bf16.mxu0 0
      %1570 = vmatmul.mubr.bf16.gmra.mxu0 %v1511
      %v1571 = vpop.f32.mrf.mxu0
      %v1572 = vadd.f32 0.0, %v1571
      %v1573 = vpop.f32.mrf.mxu0
      %v1574 = vpop.f32.mrf.mxu0
      %v1575 = vadd.f32 0.0, %v1574
      %v1576 = vpop.f32.mrf.mxu0
      %1577 = vdwg.mxu0
      %v1578 = vsel %vm506, %v1548, 0.0
      %v1579 = vsel %vm506, %v1551, 0.0
      %v1580 = vadd.f32 %v1578, %v1579
      %v1581 = vsel %vm506, %v1556, 0.0
      %v1582 = vadd.f32 %v1580, %v1581
      %v1583 = vsel %vm506, %v1559, 0.0
      %v1584 = vadd.f32 %v1582, %v1583
      %v1585 = vsel %vm506, %v1564, 0.0
      %v1586 = vadd.f32 %v1584, %v1585
      %v1587 = vsel %vm506, %v1567, 0.0
      %v1588 = vadd.f32 %v1586, %v1587
      %v1589 = vsel %vm506, %v1572, 0.0
      %v1590 = vadd.f32 %v1588, %v1589
      %v1591 = vsel %vm506, %v1575, 0.0
      %v1592 = vadd.f32 %v1590, %v1591
      %v1593 = vrot.slane %v1592, 4
      %v1594 = vadd.f32 %v1592, %v1593
      %v1595 = vrot.slane %v1594, 2
      %v1596 = vadd.f32 %v1594, %v1595
      %v1597 = vrot.slane %v1596, 1
      %v1598 = vadd.f32 %v1596, %v1597
      %v1599 = vadd.f32 %v1328, %v1598
      %v1600 = vmul.f32 %v1548, %v1548
      %v1601 = vmul.f32 %v1551, %v1551
      %v1602 = vmul.f32 %v1556, %v1556
      %v1603 = vmul.f32 %v1559, %v1559
      %v1604 = vmul.f32 %v1564, %v1564
      %v1605 = vmul.f32 %v1567, %v1567
      %v1606 = vmul.f32 %v1572, %v1572
      %v1607 = vmul.f32 %v1575, %v1575
      %v1608 = vsel %vm506, %v1600, 0.0
      %v1609 = vsel %vm506, %v1601, 0.0
      %v1610 = vadd.f32 %v1608, %v1609
      %v1611 = vsel %vm506, %v1602, 0.0
      %v1612 = vadd.f32 %v1610, %v1611
      %v1613 = vsel %vm506, %v1603, 0.0
      %v1614 = vadd.f32 %v1612, %v1613
      %v1615 = vsel %vm506, %v1604, 0.0
      %v1616 = vadd.f32 %v1614, %v1615
      %v1617 = vsel %vm506, %v1605, 0.0
      %v1618 = vadd.f32 %v1616, %v1617
      %v1619 = vsel %vm506, %v1606, 0.0
      %v1620 = vadd.f32 %v1618, %v1619
      %v1621 = vsel %vm506, %v1607, 0.0
      %v1622 = vadd.f32 %v1620, %v1621
      %v1623 = vrot.slane %v1622, 4
      %v1624 = vadd.f32 %v1622, %v1623
      %v1625 = vrot.slane %v1624, 2
      %v1626 = vadd.f32 %v1624, %v1625
      %v1627 = vrot.slane %v1626, 1
      %v1628 = vadd.f32 %v1626, %v1627
      %v1629 = vadd.f32 %v1358, %v1628
      %1638 = vrot.lane.b32.xlu0 %v1548, 24
      %v1639 = vpop.permute.xlu0 %1638
      %1640 = vrot.lane.b32.xlu0 %v1551, 24
      %v1641 = vpop.permute.xlu0 %1640
      %1642 = vrot.lane.b32.xlu0 %v1556, 24
      %v1643 = vpop.permute.xlu0 %1642
      %1644 = vrot.lane.b32.xlu0 %v1559, 24
      %v1645 = vpop.permute.xlu0 %1644
      %1646 = vrot.lane.b32.xlu0 %v1564, 24
      %v1647 = vpop.permute.xlu0 %1646
      %1648 = vrot.lane.b32.xlu0 %v1567, 24
      %v1649 = vpop.permute.xlu0 %1648
      %1650 = vrot.lane.b32.xlu0 %v1572, 24
      %v1651 = vpop.permute.xlu0 %1650
      %1652 = vrot.lane.b32.xlu0 %v1575, 24
      %v1653 = vpop.permute.xlu0 %1652
      %vm1662 = vcmask 261312
      %1663 = vst.msk [vmem:[#allocation2] sm:$0xff] %vm1662, %v1639
      %1664 = vst.msk [vmem:[#allocation2 + $0x8] sm:$0xff] %vm1662, %v1641
      %1665 = vst.msk [vmem:[#allocation2 + $0x10] sm:$0xff] %vm1662, %v1643
      %1666 = vst.msk [vmem:[#allocation2 + $0x18] sm:$0xff] %vm1662, %v1645
      %1667 = vst.msk [vmem:[#allocation2 + $0x20] sm:$0xff] %vm1662, %v1647
      %1668 = vst.msk [vmem:[#allocation2 + $0x28] sm:$0xff] %vm1662, %v1649
      %1669 = vst.msk [vmem:[#allocation2 + $0x30] sm:$0xff] %vm1662, %v1651
      %1670 = vst.msk [vmem:[#allocation2 + $0x38] sm:$0xff] %vm1662, %v1653
      %v1671 = vrcp.pop 256.0
      %v1672 = vmul.f32 %v1599, %v1671
      %v1673 = vmul.f32 %v1629, %v1671
      %v1674 = vmul.f32 %v1672, %v1672
      %v1675 = vsub.f32 %v1673, %v1674
      %v1676 = vmax.f32 %v1675, 0.0
      %v1677 = vadd.f32 %v1676, 1e-05
      %v1678 = vrsqrt.pop %v1677
      %1680 = vrot.lane.b32.xlu0 %v1672, 8
      %v1681 = vpop.permute.xlu0 %1680
      %1683 = vrot.lane.b32.xlu0 %v1672, 16
      %v1684 = vpop.permute.xlu0 %1683
      %1686 = vrot.lane.b32.xlu0 %v1672, 24
      %v1687 = vpop.permute.xlu0 %1686
      %v1689 = vsel %vm506, %v1672, %v1681
      %v1690 = vsel %vm532, %v1689, %v1684
      %vm1691 = vcmask 195584
      %v1692 = vsel %vm1691, %v1690, %v1687
      %1694 = vrot.lane.b32.xlu0 %v1678, 8
      %v1695 = vpop.permute.xlu0 %1694
      %1697 = vrot.lane.b32.xlu0 %v1678, 16
      %v1698 = vpop.permute.xlu0 %1697
      %1700 = vrot.lane.b32.xlu0 %v1678, 24
      %v1701 = vpop.permute.xlu0 %1700
      %v1703 = vsel %vm506, %v1678, %v1695
      %v1704 = vsel %vm532, %v1703, %v1698
      %v1705 = vsel %vm1691, %v1704, %v1701
      %v1706 = vld [vmem:[#allocation2] sm:$0xff]
      %v1707 = vld [vmem:[#allocation2 + $0x8] sm:$0xff]
      %v1708 = vld [vmem:[#allocation2 + $0x10] sm:$0xff]
      %v1709 = vld [vmem:[#allocation2 + $0x18] sm:$0xff]
      %v1710 = vld [vmem:[#allocation2 + $0x20] sm:$0xff]
      %v1711 = vld [vmem:[#allocation2 + $0x28] sm:$0xff]
      %v1712 = vld [vmem:[#allocation2 + $0x30] sm:$0xff]
      %v1713 = vld [vmem:[#allocation2 + $0x38] sm:$0xff]
      %v1714 = vlaneseq
      %v1715 = vshrl.u32 %v1714, 7
      %v1716 = vsub.s32 0, %v1715
      %v1717 = vrot.slane %v1692, %v1716
      %v1718 = vsub.f32 %v1706, %v1717
      %v1719 = vsub.f32 %v1707, %v1717
      %v1720 = vsub.f32 %v1708, %v1717
      %v1721 = vsub.f32 %v1709, %v1717
      %v1722 = vsub.f32 %v1710, %v1717
      %v1723 = vsub.f32 %v1711, %v1717
      %v1724 = vsub.f32 %v1712, %v1717
      %v1725 = vsub.f32 %v1713, %v1717
      %v1726 = vlaneseq
      %v1727 = vshrl.u32 %v1726, 7
      %v1728 = vsub.s32 0, %v1727
      %v1729 = vrot.slane %v1705, %v1728
      %v1730 = vmul.f32 %v1718, %v1729
      %v1731 = vmul.f32 %v1719, %v1729
      %v1732 = vmul.f32 %v1720, %v1729
      %v1733 = vmul.f32 %v1721, %v1729
      %v1734 = vmul.f32 %v1722, %v1729
      %v1735 = vmul.f32 %v1723, %v1729
      %v1736 = vmul.f32 %v1724, %v1729
      %v1737 = vmul.f32 %v1725, %v1729
      %v1738 = vmax.f32 %v1730, 0.0
      %v1739 = vmax.f32 %v1731, 0.0
      %v1740 = vmax.f32 %v1732, 0.0
      %v1741 = vmax.f32 %v1733, 0.0
      %v1742 = vmax.f32 %v1734, 0.0
      %v1743 = vmax.f32 %v1735, 0.0
      %v1744 = vmax.f32 %v1736, 0.0
      %v1745 = vmax.f32 %v1737, 0.0
      %vm1746 = vcmask 261120
      %1747 = vst.msk [vmem:[%s143] sm:$0xff] %vm1746, %v1738
      %1748 = vst.msk [vmem:[%s143 + $0x8] sm:$0xff] %vm1746, %v1739
      %1749 = vst.msk [vmem:[%s143 + $0x10] sm:$0xff] %vm1746, %v1740
      %1750 = vst.msk [vmem:[%s143 + $0x18] sm:$0xff] %vm1746, %v1741
      %1751 = vst.msk [vmem:[%s143 + $0x20] sm:$0xff] %vm1746, %v1742
      %1752 = vst.msk [vmem:[%s143 + $0x28] sm:$0xff] %vm1746, %v1743
      %1753 = vst.msk [vmem:[%s143 + $0x30] sm:$0xff] %vm1746, %v1744
      %1754 = vst.msk [vmem:[%s143 + $0x38] sm:$0xff] %vm1746, %v1745
      %p1755 = scmp.lt.s32.totalorder %s13, 1
      %s1756 = scalar_select %p1755, %s13, 1
      %s1757 = smul.addr %s1756, 8
      %s1758 = smul.addr %s1757, 8
      %s1759 = scalar_lea.vmem %s2, %s1758
      // Predicated region
      $region29: #{tpu_custom_call.1} parent=27 // pred_check
        %p1760 = pneg %p78
      $region30: #{tpu_custom_call.1} parent=27 // pred_check_branch
        %1762 = sbr.rel (%p1760) target = $region32
      $region31: #{tpu_custom_call.1} parent=27 // pred_region
        _
      $region32: #{tpu_custom_call.1} parent=27 // pred_fallthru
        _
    $region28: #{tpu_custom_call.1} parent=5 // pred_fallthru
      _
    %p1763 = scmp.le.s32.totalorder 2, %s8
    // Predicated region
    $region33: #{tpu_custom_call.1} parent=5 // pred_check
      %p1764 = pneg %p1763
    $region34: #{tpu_custom_call.1} parent=5 // pred_check_branch
      %1766 = sbr.rel (%p1764) target = $region36
    $region35: #{tpu_custom_call.1} parent=5 // pred_region
      %s1767 = ssub.s32 %s8, 2
      // Predicated region
      $region37: #{tpu_custom_call.1} parent=35 // pred_check
        %p1768 = pneg %p84
      $region38: #{tpu_custom_call.1} parent=35 // pred_check_branch
        %1770 = sbr.rel (%p1768) target = $region40
      $region39: #{tpu_custom_call.1} parent=35 // pred_region
        %p1771 = scmp.lt.s32.totalorder %s14, 1
        %s1772 = scalar_select %p1771, %s14, 1
        %s1773 = smul.addr %s1772, 8
        %s1774 = smul.addr %s1773, 8
        %s1775 = scalar_lea.vmem %s2, %s1774
      $region40: #{tpu_custom_call.1} parent=35 // pred_fallthru
        _
    $region36: #{tpu_custom_call.1} parent=5 // pred_fallthru
      _
  $region6: #{tpu_custom_call.1} parent=0 // loop_footer
    %s12 = sadd.s32 1, %s8
  $region7: #{tpu_custom_call.1} parent=0 // loop_footer_branch
    %7 = sbr.rel target = $region3
  $region8: #{tpu_custom_call.1} parent=0 // loop_exit
    _

</llo_original>
